<compile_context>
chip_gen: v5e
topology: v5e:2x2
jax: 0.10.0
libtpu: 0.0.40
codegen_flags: <defaults>
</compile_context>

<pallas_src>
import functools

import jax
import jax.numpy as jnp
import numpy as np
from jax.experimental import pallas as pl
from jax.experimental.pallas import tpu as pltpu

V_TH = 1.0     # IFNode default v_threshold
V_RESET = 0.0  # IFNode default v_reset (hard reset)


# ----------------------------------- small helpers -----------------------------------
def _round_up(x, m):
    return (x + m - 1) // m * m


def _largest_divisor_leq(n, cap):
    for d in range(max(1, min(n, cap)), 0, -1):
        if n % d == 0:
            return d
    return 1


def _frame_geom(h, w):
    """Padded-frame geometry for an (h, w) image with a 1-pixel zero border."""
    hp, wp = h + 2, w + 2
    f = hp * wp
    f_pad = _round_up(f, 128)      # lane-align each image's flattened frame
    return hp, wp, f, f_pad


def _tap_offsets(wp, ksize):
    """Flat-frame offset of the input element feeding output position p, per (ky,kx)."""
    r = ksize // 2
    return tuple((ky - r) * wp + (kx - r) for ky in range(ksize) for kx in range(ksize))


def _shift_last(x, off):
    """xs[..., p] = x[..., p + off].  Tiles are whole padded frames, so the roll's
    wrap-around lanes land only on border/pad positions that are masked or discarded."""
    if off == 0:
        return x
    size = x.shape[-1]
    return pltpu.roll(x, (-off) % size, x.ndim - 1)


# ------------------- Kernel 1: sn1 -> 3x3 conv + folded BN -> sn2 (fused) -------------------
def _if_conv_if_kernel(x_ref, w_ref, b_ref, mask_ref, o_ref, v1_ref, v2_ref, *, offsets):
    t = pl.program_id(1)

    @pl.when(t == 0)
    def _():
        v1_ref[...] = jnp.zeros_like(v1_ref)
        v2_ref[...] = jnp.zeros_like(v2_ref)

    # sn1: charge with the raw input, fire, hard reset (borders are zero so border spikes are 0).
    v1 = v1_ref[...] + x_ref[0]
    fired1 = v1 >= V_TH
    s1 = jnp.where(fired1, 1.0, 0.0)                 # f32 spikes {0,1}
    v1_ref[...] = jnp.where(fired1, V_RESET, v1)

    # 3x3 conv + BN (scale folded into bf16 weights, bias added here); 9 shifted MXU matmuls.
    acc = b_ref[...]                                 # [Cout, 1] f32, broadcasts on first add
    for i, off in enumerate(offsets):
        xs = _shift_last(s1, off).astype(jnp.bfloat16)
        acc = acc + jnp.dot(w_ref[i], xs, preferred_element_type=jnp.float32)

    # sn2 on the conv output; spikes outside the true image interior are forced to zero so
    # the next conv sees proper zero padding.
    v2 = v2_ref[...] + acc
    fired2 = v2 >= V_TH
    o_ref[0] = jnp.where(fired2, mask_ref[...], 0.0).astype(o_ref.dtype)
    v2_ref[...] = jnp.where(fired2, V_RESET, v2)


def _fused_if_conv_if(x_frames, w_taps, bias, mask, f_pad, offsets, *, vmem_budget=12 * 2**20):
    """x_frames f32 [T, Cin, L]; w_taps bf16 [k, Cout, Cin]; bias f32 [Cout,1]; mask f32 [1, L].
    Returns bf16 spikes [T, Cout, L]."""
    T, cin, L = x_frames.shape
    ntaps, cout, _ = w_taps.shape
    assert L % f_pad == 0 and f_pad % 128 == 0
    n_img = L // f_pad
    per_img = f_pad * (cin * 4 * 2 + cout * 2 * 2 + 4 * 2 + (cin + cout) * 4)
    nb = _largest_divisor_leq(n_img, max(1, vmem_budget // max(per_img, 1)))
    tile = nb * f_pad
    n_tiles = n_img // nb
    assert tile % 128 == 0

    kern = functools.partial(_if_conv_if_kernel, offsets=tuple(offsets))
    return pl.pallas_call(
        kern,
        out_shape=jax.ShapeDtypeStruct((T, cout, L), jnp.bfloat16),
        grid_spec=pltpu.PrefetchScalarGridSpec(
            num_scalar_prefetch=0,
            grid=(n_tiles, T),                       # spatial tiles outer, T innermost (stateful)
            in_specs=[
                pl.BlockSpec((1, cin, tile), lambda l, t: (t, 0, l)),
                pl.BlockSpec((ntaps, cout, cin), lambda l, t: (0, 0, 0)),
                pl.BlockSpec((cout, 1), lambda l, t: (0, 0)),
                pl.BlockSpec((1, tile), lambda l, t: (0, l)),
            ],
            out_specs=pl.BlockSpec((1, cout, tile), lambda l, t: (t, 0, l)),
            scratch_shapes=[
                pltpu.VMEM((cin, tile), jnp.float32),    # sn1 membrane
                pltpu.VMEM((cout, tile), jnp.float32),   # sn2 membrane
            ],
        ),
        compiler_params=pltpu.CompilerParams(
            dimension_semantics=("parallel", "arbitrary")),
    )(x_frames, w_taps, bias, mask)


# ------------------- Kernel 2: conv + folded BN (+ optional fused residual) -------------------
def _conv_bn_kernel(x_ref, w_ref, b_ref, o_ref, *, offsets, mxu_dtype, precision):
    x = x_ref[0].astype(jnp.float32)
    acc = b_ref[...]
    for i, off in enumerate(offsets):
        xs = _shift_last(x, off).astype(mxu_dtype)
        acc = acc + jnp.dot(w_ref[i], xs, preferred_element_type=jnp.float32,
                            precision=precision)
    o_ref[0] = acc.astype(o_ref.dtype)


def _conv_bn_res_kernel(x_ref, w_ref, b_ref, r_ref, o_ref, *, offsets, mxu_dtype, precision):
    x = x_ref[0].astype(jnp.float32)
    acc = b_ref[...]
    for i, off in enumerate(offsets):
        xs = _shift_last(x, off).astype(mxu_dtype)
        acc = acc + jnp.dot(w_ref[i], xs, preferred_element_type=jnp.float32,
                            precision=precision)
    o_ref[0] = (acc + r_ref[0]).astype(o_ref.dtype)   # fused residual add


def _conv_bn(x_frames, w_taps, bias, f_pad, offsets, *, residual=None,
             mxu_dtype=jnp.bfloat16, precision=None, vmem_budget=12 * 2**20):
    """x_frames [T, Cin, L]; w_taps [k, Cout, Cin]; bias [Cout,1]; residual optional
    [T, Cout, L] f32.  Returns f32 [T, Cout, L].  Grid is a single flattened parallel axis
    (T merged into the spatial tiling) so megacore splits evenly."""
    T, cin, L = x_frames.shape
    ntaps, cout, _ = w_taps.shape
    assert L % f_pad == 0 and f_pad % 128 == 0
    n_img = L // f_pad
    in_b = x_frames.dtype.itemsize
    res_b = 0 if residual is None else cout * residual.dtype.itemsize
    per_img = f_pad * 2 * (cin * in_b + res_b + cout * 4)       # double-buffered blocks
    nb = _largest_divisor_leq(n_img, max(1, vmem_budget // max(per_img, 1)))
    tile = nb * f_pad
    n_tiles = n_img // nb
    assert tile % 128 == 0

    def xmap(g):
        return (g // n_tiles, 0, g % n_tiles)

    in_specs = [
        pl.BlockSpec((1, cin, tile), xmap),
        pl.BlockSpec((ntaps, cout, cin), lambda g: (0, 0, 0)),
        pl.BlockSpec((cout, 1), lambda g: (0, 0)),
    ]
    args = [x_frames, w_taps, bias]
    if residual is None:
        kern = functools.partial(_conv_bn_kernel, offsets=tuple(offsets),
                                 mxu_dtype=mxu_dtype, precision=precision)
    else:
        kern = functools.partial(_conv_bn_res_kernel, offsets=tuple(offsets),
                                 mxu_dtype=mxu_dtype, precision=precision)
        in_specs.append(pl.BlockSpec((1, cout, tile), xmap))
        args.append(residual)

    return pl.pallas_call(
        kern,
        out_shape=jax.ShapeDtypeStruct((T, cout, L), jnp.float32),
        grid_spec=pltpu.PrefetchScalarGridSpec(
            num_scalar_prefetch=0,
            grid=(T * n_tiles,),
            in_specs=in_specs,
            out_specs=pl.BlockSpec((1, cout, tile), xmap),
        ),
        compiler_params=pltpu.CompilerParams(dimension_semantics=("parallel",)),
    )(*args)


# -------------------------------------- Host-side glue --------------------------------------
def _fold_bn(w, gamma, beta, mean, var, eps):
    """Fold inference-mode BN into the conv weight and a bias.  The folded weight is rounded
    to bf16 (deliberate numerics change for the single-pass MXU path); the reference uses the
    SAME rounded weights so the comparison stays tight."""
    scale = gamma / jnp.sqrt(var + eps)
    w_f = (w * scale[:, None, None, None]).astype(jnp.bfloat16).astype(jnp.float32)
    bias = (beta - mean * scale).astype(jnp.float32)
    return w_f, bias


def _pack_taps(w_folded, c_in_pad, c_out_pad, dtype):
    cout, cin, kh, kw = w_folded.shape
    wt = jnp.transpose(w_folded, (2, 3, 0, 1)).reshape(kh * kw, cout, cin)
    wt = jnp.pad(wt, ((0, 0), (0, c_out_pad - cout), (0, c_in_pad - cin)))
    return wt.astype(dtype)


def _pack_bias(bias, c_out_pad):
    return jnp.pad(bias, (0, c_out_pad - bias.shape[0]))[:, None].astype(jnp.float32)


def _build_frames(x, c_pad, f_pad):
    """x [T, N, C, H, W] -> zero-bordered padded frames [T, c_pad, N*f_pad] (f32)."""
    T, N, C, H, W = x.shape
    hp, wp = H + 2, W + 2
    xf = jnp.pad(x, ((0, 0), (0, 0), (0, c_pad - C), (1, 1), (1, 1)))
    xf = jnp.transpose(xf, (0, 2, 1, 3, 4)).reshape(T, c_pad, N, hp * wp)
    xf = jnp.pad(xf, ((0, 0), (0, 0), (0, 0), (0, f_pad - hp * wp)))
    return xf.reshape(T, c_pad, N * f_pad).astype(jnp.float32)


def _interior_mask(n, h, w, f_pad):
    hp, wp = h + 2, w + 2
    m = np.zeros((hp, wp), np.float32)
    m[1:h + 1, 1:w + 1] = 1.0
    flat = np.zeros((f_pad,), np.float32)
    flat[:hp * wp] = m.reshape(-1)
    return jnp.asarray(np.tile(flat, n)[None, :])


def _subsample_frames(s, n, h_in, w_in, f_pad_in, stride, f_pad_out):
    """Spike frames at full res -> strided to the output geometry (pointwise, so it commutes
    with the IF neuron).  Host-side gather on a small bf16 tensor."""
    T, c, _ = s.shape
    hp_i, wp_i = h_in + 2, w_in + 2
    h_o = (h_in - 1) // stride + 1
    w_o = (w_in - 1) // stride + 1
    hp_o, wp_o = h_o + 2, w_o + 2
    v = s.reshape(T, c, n, f_pad_in)[..., :hp_i * wp_i].reshape(T, c, n, hp_i, wp_i)
    v = v[:, :, :, 1:h_in + 1:stride, 1:w_in + 1:stride]
    v = jnp.pad(v, ((0, 0), (0, 0), (0, 0), (1, 1), (1, 1)))
    v = v.reshape(T, c, n, hp_o * wp_o)
    v = jnp.pad(v, ((0, 0), (0, 0), (0, 0), (0, f_pad_out - hp_o * wp_o)))
    return v.reshape(T, c, n * f_pad_out)


def _frames_to_nchw(y, n, c, h, w, f_pad):
    T = y.shape[0]
    hp, wp = h + 2, w + 2
    y = y.reshape(T, -1, n, f_pad)[..., :hp * wp].reshape(T, -1, n, hp, wp)
    y = y[:, :c, :, 1:h + 1, 1:w + 1]
    return jnp.transpose(y, (0, 2, 1, 3, 4))


def basic_block_forward(x, conv1_p, conv2_p, downsample_p=None, *, stride=1, eps=1e-5):
    """x: [T, N, C, H, W] f32.  conv*_p / downsample_p = (w, gamma, beta, mean, var).
    Returns [T, N, planes, Ho, Wo]."""
    T, N, C, H, W = x.shape
    x = x.astype(jnp.float32)
    planes = conv1_p[0].shape[0]
    cp_in = _round_up(C, 8)
    cp_out = _round_up(planes, 8)

    hp_in, wp_in, f_in, f_in_pad = _frame_geom(H, W)
    Ho = (H - 1) // stride + 1
    Wo = (W - 1) // stride + 1
    hp_mid, wp_mid, f_mid, f_mid_pad = _frame_geom(Ho, Wo)

    # --- stage 1: sn1 -> conv1+BN1 -> sn2, one fused kernel (computed at stride 1) ---
    w1, b1 = _fold_bn(conv1_p[0], *conv1_p[1:], eps)
    w1_taps = _pack_taps(w1, cp_in, cp_out, jnp.bfloat16)
    bias1 = _pack_bias(b1, cp_out)
    x_frames = _build_frames(x, cp_in, f_in_pad)
    mask_in = _interior_mask(N, H, W, f_in_pad)
    s2 = _fused_if_conv_if(x_frames, w1_taps, bias1, mask_in, f_in_pad,
                           _tap_offsets(wp_in, 3))

    if stride != 1:
        # TODO(synk): fold the stride into the conv1 kernel access pattern instead.
        s2 = _subsample_frames(s2, N, H, W, f_in_pad, stride, f_mid_pad)

    # --- identity / downsample path ---
    if downsample_p is not None:
        wd, bd = _fold_bn(downsample_p[0], *downsample_p[1:], eps)
        wd_taps = _pack_taps(wd, cp_in, cp_out, jnp.float32)
        biasd = _pack_bias(bd, cp_out)
        xd_frames = _build_frames(x[:, :, :, ::stride, ::stride], cp_in, f_mid_pad)
        # Tiny 1x1 matmul; keep f32/HIGHEST so it matches the reference exactly.
        identity = _conv_bn(xd_frames, wd_taps, biasd, f_mid_pad, (0,),
                            mxu_dtype=jnp.float32,
                            precision=jax.lax.Precision.HIGHEST)
    else:
        assert stride == 1 and C == planes, "identity shortcut needs stride=1, C==planes"
        identity = x_frames

    # --- stage 2: conv2+BN2 with the residual fused into the epilogue ---
    w2, b2 = _fold_bn(conv2_p[0], *conv2_p[1:], eps)
    w2_taps = _pack_taps(w2, cp_out, cp_out, jnp.bfloat16)
    bias2 = _pack_bias(b2, cp_out)
    out = _conv_bn(s2, w2_taps, bias2, f_mid_pad, _tap_offsets(wp_mid, 3),
                   residual=identity)

    return _frames_to_nchw(out, N, planes, Ho, Wo, f_mid_pad)


# -------------------------------------- Pure-JAX reference --------------------------------------
def _if_ref(x):
    def step(v, xt):
        v = v + xt
        fired = v >= V_TH
        spike = fired.astype(x.dtype)
        v = jnp.where(fired, V_RESET, v)
        return v, spike

    _, spikes = jax.lax.scan(step, jnp.zeros_like(x[0]), x)
    return spikes


def _seq_conv_bn_ref(x, w, gamma, beta, mean, var, *, stride, eps=1e-5):
    """conv + BN (running stats), using the SAME bf16-rounded folded weights as the kernels."""
    T, N, C, H, W = x.shape
    w_f, bias = _fold_bn(w, gamma, beta, mean, var, eps)
    xf = x.reshape(T * N, C, H, W)
    pad = (w.shape[2] - 1) // 2
    y = jax.lax.conv_general_dilated(
        xf, w_f, window_strides=(stride, stride),
        padding=((pad, pad), (pad, pad)),
        dimension_numbers=('NCHW', 'OIHW', 'NCHW'),
        precision=jax.lax.Precision.HIGHEST)
    y = y + bias[None, :, None, None]
    return y.reshape(T, N, y.shape[1], y.shape[2], y.shape[3])


def basic_block_reference(x, conv1_p, conv2_p, downsample_p=None, *, stride=1, eps=1e-5):
    s1 = _if_ref(x)
    o1 = _seq_conv_bn_ref(s1, *conv1_p, stride=stride, eps=eps)
    s2 = _if_ref(o1)
    o2 = _seq_conv_bn_ref(s2, *conv2_p, stride=1, eps=eps)
    identity = x if downsample_p is None else _seq_conv_bn_ref(x, *downsample_p,
                                                               stride=stride, eps=eps)
    return o2 + identity


def _assert_close(name, out, ref, tol=1e-3, max_bad_frac=5e-3):
    """Spiking nets amplify ~1e-6 summation-order differences into rare discrete spike flips
    at the IF threshold; allow a vanishing fraction of such flips while still catching any
    real layout/offset/mask bug (which corrupts a large fraction of elements)."""
    out = np.asarray(out, np.float64)
    ref = np.asarray(ref, np.float64)
    assert out.shape == ref.shape
    err = np.abs(out - ref) / np.maximum(np.abs(ref), 1.0)
    bad = float((err > tol).mean())
    if bad > max_bad_frac:
        raise AssertionError(
            f"{name}: {bad:.4%} of elements exceed tol (max rel err {err.max():.3e})")


if __name__ == "__main__":
    key = jax.random.PRNGKey(0)

    def make_conv_bn(k, cout, cin, ksz):
        kw, kg, kb, km, kv = jax.random.split(k, 5)
        w = 0.3 * jax.random.normal(kw, (cout, cin, ksz, ksz), jnp.float32)
        gamma = 1.0 + 0.1 * jax.random.normal(kg, (cout,), jnp.float32)
        beta = 0.1 * jax.random.normal(kb, (cout,), jnp.float32)
        mean = 0.1 * jax.random.normal(km, (cout,), jnp.float32)
        var = jnp.abs(1.0 + 0.1 * jax.random.normal(kv, (cout,), jnp.float32))
        return (w, gamma, beta, mean, var)

    # ---- Config A: BasicBlock(inplanes=4, planes=4, stride=1, downsample=None) ----
    T, N, C, H, W = 4, 2, 4, 16, 16
    planes = 4
    k0, k1, k2, k3 = jax.random.split(key, 4)
    x = jax.random.normal(k0, (T, N, C, H, W), dtype=jnp.float32)
    p1 = make_conv_bn(k1, planes, C, 3)
    p2 = make_conv_bn(k2, planes, planes, 3)

    out = jax.block_until_ready(basic_block_forward(x, p1, p2, None, stride=1))
    assert out.shape == (T, N, planes, H, W)
    ref = basic_block_reference(x, p1, p2, None, stride=1)
    _assert_close("stride=1", out, ref)

    # ---- Config B: BasicBlock(inplanes=4, planes=8, stride=2, downsample=conv1x1+BN) ----
    planes_b = 8
    kb0, kb1, kb2, kb3 = jax.random.split(k3, 4)
    xb = jax.random.normal(kb0, (T, N, C, H, W), dtype=jnp.float32)
    p1b = make_conv_bn(kb1, planes_b, C, 3)
    p2b = make_conv_bn(kb2, planes_b, planes_b, 3)
    pdb = make_conv_bn(kb3, planes_b, C, 1)

    outb = jax.block_until_ready(basic_block_forward(xb, p1b, p2b, pdb, stride=2))
    assert outb.shape == (T, N, planes_b, H // 2, W // 2)
    refb = basic_block_reference(xb, p1b, p2b, pdb, stride=2)
    _assert_close("stride=2", outb, refb)

    print("KERNEL_OK")
</pallas_src>

<mosaic_0001>
module attributes {stable_mosaic.version = 11 : i64} {
  func.func @_if_conv_if_kernel(%arg0: i32, %arg1: i32, %arg2: memref<1x8x768xf32, #tpu.memory_space<vmem>>, %arg3: memref<9x8x8xbf16, #tpu.memory_space<vmem>>, %arg4: memref<8x1xf32, #tpu.memory_space<vmem>>, %arg5: memref<1x768xf32, #tpu.memory_space<vmem>>, %arg6: memref<1x8x768xbf16, #tpu.memory_space<vmem>>, %arg7: memref<8x768xf32, #tpu.memory_space<vmem>>, %arg8: memref<8x768xf32, #tpu.memory_space<vmem>>) attributes {dimension_semantics = [#tpu.dimension_semantics<parallel>, #tpu.dimension_semantics<arbitrary>], iteration_bounds = array<i64: 1, 4>, scalar_prefetch = 0 : i64, scratch_operands = 2 : i64, tpu.core_type = #tpu.core_type<tc>, window_params = [{transform_indices = @transform_0, window_bounds = array<i64: 1, 8, 768>}, {pipeline_mode = #tpu.pipeline_mode<synchronous>, transform_indices = @transform_1, window_bounds = array<i64: 9, 8, 8>}, {pipeline_mode = #tpu.pipeline_mode<synchronous>, transform_indices = @transform_2, window_bounds = array<i64: 8, 1>}, {transform_indices = @transform_3, window_bounds = array<i64: 1, 768>}, {transform_indices = @transform_4, window_bounds = array<i64: 1, 8, 768>}]} {
    %c0_i32 = arith.constant 0 : i32
    %0 = arith.cmpi eq, %arg1, %c0_i32 : i32
    %1 = arith.extui %0 : i1 to i32
    %c0_i32_0 = arith.constant 0 : i32
    %2 = arith.cmpi ne, %1, %c0_i32_0 : i32
    scf.if %2 {
      %cst_52 = arith.constant 0.000000e+00 : f32
      %86 = vector.broadcast %cst_52 : f32 to vector<8x768xf32>
      %c0_53 = arith.constant 0 : index
      %c0_54 = arith.constant 0 : index
      %87 = vector.load %arg7[%c0_53, %c0_54] : memref<8x768xf32, #tpu.memory_space<vmem>>, vector<8x768xf32>
      tpu.vector_store %arg7[%c0_53, %c0_54], %86 {strides = array<i32>} : memref<8x768xf32, #tpu.memory_space<vmem>>, vector<8x768xf32>,
      %cst_55 = arith.constant 0.000000e+00 : f32
      %88 = vector.broadcast %cst_55 : f32 to vector<8x768xf32>
      %c0_56 = arith.constant 0 : index
      %c0_57 = arith.constant 0 : index
      %89 = vector.load %arg8[%c0_56, %c0_57] : memref<8x768xf32, #tpu.memory_space<vmem>>, vector<8x768xf32>
      tpu.vector_store %arg8[%c0_56, %c0_57], %88 {strides = array<i32>} : memref<8x768xf32, #tpu.memory_space<vmem>>, vector<8x768xf32>,
    } else {
    }
    %c0 = arith.constant 0 : index
    %c0_1 = arith.constant 0 : index
    %3 = vector.load %arg7[%c0, %c0_1] : memref<8x768xf32, #tpu.memory_space<vmem>>, vector<8x768xf32>
    %c0_2 = arith.constant 0 : index
    %c0_3 = arith.constant 0 : index
    %c0_4 = arith.constant 0 : index
    %4 = vector.load %arg2[%c0_2, %c0_3, %c0_4] : memref<1x8x768xf32, #tpu.memory_space<vmem>>, vector<1x8x768xf32>
    %5 = vector.shape_cast %4 : vector<1x8x768xf32> to vector<8x768xf32>
    %6 = arith.addf %3, %5 : vector<8x768xf32>
    %cst = arith.constant 1.000000e+00 : f32
    %7 = vector.broadcast %cst : f32 to vector<8x768xf32>
    %8 = arith.cmpf oge, %6, %7 : vector<8x768xf32>
    %cst_5 = arith.constant 1.000000e+00 : f32
    %cst_6 = arith.constant 0.000000e+00 : f32
    %9 = vector.broadcast %cst_5 : f32 to vector<8x768xf32>
    %10 = vector.broadcast %cst_6 : f32 to vector<8x768xf32>
    %11 = arith.select %8, %9, %10 : vector<8x768xi1>, vector<8x768xf32>
    %cst_7 = arith.constant 0.000000e+00 : f32
    %12 = vector.broadcast %cst_7 : f32 to vector<8x768xf32>
    %13 = arith.select %8, %12, %6 : vector<8x768xi1>, vector<8x768xf32>
    %c0_8 = arith.constant 0 : index
    %c0_9 = arith.constant 0 : index
    %14 = vector.load %arg7[%c0_8, %c0_9] : memref<8x768xf32, #tpu.memory_space<vmem>>, vector<8x768xf32>
    tpu.vector_store %arg7[%c0_8, %c0_9], %13 {strides = array<i32>} : memref<8x768xf32, #tpu.memory_space<vmem>>, vector<8x768xf32>,
    %c0_10 = arith.constant 0 : index
    %c0_11 = arith.constant 0 : index
    %15 = vector.load %arg4[%c0_10, %c0_11] : memref<8x1xf32, #tpu.memory_space<vmem>>, vector<8x1xf32>
    %c19_i32 = arith.constant 19 : i32
    %16 = tpu.dynamic_rotate %11 by %c19_i32 dim 1 : vector<8x768xf32>, i32 -> vector<8x768xf32>
    %17 = arith.truncf %16 : vector<8x768xf32> to vector<8x768xbf16>
    %c0_12 = arith.constant 0 : index
    %c0_13 = arith.constant 0 : index
    %c0_14 = arith.constant 0 : index
    %18 = vector.load %arg3[%c0_12, %c0_13, %c0_14] : memref<9x8x8xbf16, #tpu.memory_space<vmem>>, vector<1x8x8xbf16>
    %19 = vector.shape_cast %18 : vector<1x8x8xbf16> to vector<8x8xbf16>
    %cst_15 = arith.constant dense<0.000000e+00> : vector<8x768xf32>
    %20 = tpu.matmul %19, %17, %cst_15 {dimension_numbers = #tpu.dot_dimension_numbers<[1], [0], [0], [1], [0, 0, 1, 1], [], []>} : vector<8x8xbf16>, vector<8x768xbf16>, vector<8x768xf32> -> vector<8x768xf32>
    %21 = vector.broadcast %15 : vector<8x1xf32> to vector<8x768xf32>
    %22 = arith.addf %21, %20 : vector<8x768xf32>
    %c18_i32 = arith.constant 18 : i32
    %23 = tpu.dynamic_rotate %11 by %c18_i32 dim 1 : vector<8x768xf32>, i32 -> vector<8x768xf32>
    %24 = arith.truncf %23 : vector<8x768xf32> to vector<8x768xbf16>
    %c1 = arith.constant 1 : index
    %c0_16 = arith.constant 0 : index
    %c0_17 = arith.constant 0 : index
    %25 = vector.load %arg3[%c1, %c0_16, %c0_17] : memref<9x8x8xbf16, #tpu.memory_space<vmem>>, vector<1x8x8xbf16>
    %26 = vector.shape_cast %25 : vector<1x8x8xbf16> to vector<8x8xbf16>
    %cst_18 = arith.constant dense<0.000000e+00> : vector<8x768xf32>
    %27 = tpu.matmul %26, %24, %cst_18 {dimension_numbers = #tpu.dot_dimension_numbers<[1], [0], [0], [1], [0, 0, 1, 1], [], []>} : vector<8x8xbf16>, vector<8x768xbf16>, vector<8x768xf32> -> vector<8x768xf32>
    %28 = arith.addf %22, %27 : vector<8x768xf32>
    %c17_i32 = arith.constant 17 : i32
    %29 = tpu.dynamic_rotate %11 by %c17_i32 dim 1 : vector<8x768xf32>, i32 -> vector<8x768xf32>
    %30 = arith.truncf %29 : vector<8x768xf32> to vector<8x768xbf16>
    %c2 = arith.constant 2 : index
    %c0_19 = arith.constant 0 : index
    %c0_20 = arith.constant 0 : index
    %31 = vector.load %arg3[%c2, %c0_19, %c0_20] : memref<9x8x8xbf16, #tpu.memory_space<vmem>>, vector<1x8x8xbf16>
    %32 = vector.shape_cast %31 : vector<1x8x8xbf16> to vector<8x8xbf16>
    %cst_21 = arith.constant dense<0.000000e+00> : vector<8x768xf32>
    %33 = tpu.matmul %32, %30, %cst_21 {dimension_numbers = #tpu.dot_dimension_numbers<[1], [0], [0], [1], [0, 0, 1, 1], [], []>} : vector<8x8xbf16>, vector<8x768xbf16>, vector<8x768xf32> -> vector<8x768xf32>
    %34 = arith.addf %28, %33 : vector<8x768xf32>
    %c1_i32 = arith.constant 1 : i32
    %35 = tpu.dynamic_rotate %11 by %c1_i32 dim 1 : vector<8x768xf32>, i32 -> vector<8x768xf32>
    %36 = arith.truncf %35 : vector<8x768xf32> to vector<8x768xbf16>
    %c3 = arith.constant 3 : index
    %c0_22 = arith.constant 0 : index
    %c0_23 = arith.constant 0 : index
    %37 = vector.load %arg3[%c3, %c0_22, %c0_23] : memref<9x8x8xbf16, #tpu.memory_space<vmem>>, vector<1x8x8xbf16>
    %38 = vector.shape_cast %37 : vector<1x8x8xbf16> to vector<8x8xbf16>
    %cst_24 = arith.constant dense<0.000000e+00> : vector<8x768xf32>
    %39 = tpu.matmul %38, %36, %cst_24 {dimension_numbers = #tpu.dot_dimension_numbers<[1], [0], [0], [1], [0, 0, 1, 1], [], []>} : vector<8x8xbf16>, vector<8x768xbf16>, vector<8x768xf32> -> vector<8x768xf32>
    %40 = arith.addf %34, %39 : vector<8x768xf32>
    %41 = arith.truncf %11 : vector<8x768xf32> to vector<8x768xbf16>
    %c4 = arith.constant 4 : index
    %c0_25 = arith.constant 0 : index
    %c0_26 = arith.constant 0 : index
    %42 = vector.load %arg3[%c4, %c0_25, %c0_26] : memref<9x8x8xbf16, #tpu.memory_space<vmem>>, vector<1x8x8xbf16>
    %43 = vector.shape_cast %42 : vector<1x8x8xbf16> to vector<8x8xbf16>
    %cst_27 = arith.constant dense<0.000000e+00> : vector<8x768xf32>
    %44 = tpu.matmul %43, %41, %cst_27 {dimension_numbers = #tpu.dot_dimension_numbers<[1], [0], [0], [1], [0, 0, 1, 1], [], []>} : vector<8x8xbf16>, vector<8x768xbf16>, vector<8x768xf32> -> vector<8x768xf32>
    %45 = arith.addf %40, %44 : vector<8x768xf32>
    %c767_i32 = arith.constant 767 : i32
    %46 = tpu.dynamic_rotate %11 by %c767_i32 dim 1 : vector<8x768xf32>, i32 -> vector<8x768xf32>
    %47 = arith.truncf %46 : vector<8x768xf32> to vector<8x768xbf16>
    %c5 = arith.constant 5 : index
    %c0_28 = arith.constant 0 : index
    %c0_29 = arith.constant 0 : index
    %48 = vector.load %arg3[%c5, %c0_28, %c0_29] : memref<9x8x8xbf16, #tpu.memory_space<vmem>>, vector<1x8x8xbf16>
    %49 = vector.shape_cast %48 : vector<1x8x8xbf16> to vector<8x8xbf16>
    %cst_30 = arith.constant dense<0.000000e+00> : vector<8x768xf32>
    %50 = tpu.matmul %49, %47, %cst_30 {dimension_numbers = #tpu.dot_dimension_numbers<[1], [0], [0], [1], [0, 0, 1, 1], [], []>} : vector<8x8xbf16>, vector<8x768xbf16>, vector<8x768xf32> -> vector<8x768xf32>
    %51 = arith.addf %45, %50 : vector<8x768xf32>
    %c751_i32 = arith.constant 751 : i32
    %52 = tpu.dynamic_rotate %11 by %c751_i32 dim 1 : vector<8x768xf32>, i32 -> vector<8x768xf32>
    %53 = arith.truncf %52 : vector<8x768xf32> to vector<8x768xbf16>
    %c6 = arith.constant 6 : index
    %c0_31 = arith.constant 0 : index
    %c0_32 = arith.constant 0 : index
    %54 = vector.load %arg3[%c6, %c0_31, %c0_32] : memref<9x8x8xbf16, #tpu.memory_space<vmem>>, vector<1x8x8xbf16>
    %55 = vector.shape_cast %54 : vector<1x8x8xbf16> to vector<8x8xbf16>
    %cst_33 = arith.constant dense<0.000000e+00> : vector<8x768xf32>
    %56 = tpu.matmul %55, %53, %cst_33 {dimension_numbers = #tpu.dot_dimension_numbers<[1], [0], [0], [1], [0, 0, 1, 1], [], []>} : vector<8x8xbf16>, vector<8x768xbf16>, vector<8x768xf32> -> vector<8x768xf32>
    %57 = arith.addf %51, %56 : vector<8x768xf32>
    %c750_i32 = arith.constant 750 : i32
    %58 = tpu.dynamic_rotate %11 by %c750_i32 dim 1 : vector<8x768xf32>, i32 -> vector<8x768xf32>
    %59 = arith.truncf %58 : vector<8x768xf32> to vector<8x768xbf16>
    %c7 = arith.constant 7 : index
    %c0_34 = arith.constant 0 : index
    %c0_35 = arith.constant 0 : index
    %60 = vector.load %arg3[%c7, %c0_34, %c0_35] : memref<9x8x8xbf16, #tpu.memory_space<vmem>>, vector<1x8x8xbf16>
    %61 = vector.shape_cast %60 : vector<1x8x8xbf16> to vector<8x8xbf16>
    %cst_36 = arith.constant dense<0.000000e+00> : vector<8x768xf32>
    %62 = tpu.matmul %61, %59, %cst_36 {dimension_numbers = #tpu.dot_dimension_numbers<[1], [0], [0], [1], [0, 0, 1, 1], [], []>} : vector<8x8xbf16>, vector<8x768xbf16>, vector<8x768xf32> -> vector<8x768xf32>
    %63 = arith.addf %57, %62 : vector<8x768xf32>
    %c749_i32 = arith.constant 749 : i32
    %64 = tpu.dynamic_rotate %11 by %c749_i32 dim 1 : vector<8x768xf32>, i32 -> vector<8x768xf32>
    %65 = arith.truncf %64 : vector<8x768xf32> to vector<8x768xbf16>
    %c8 = arith.constant 8 : index
    %c0_37 = arith.constant 0 : index
    %c0_38 = arith.constant 0 : index
    %66 = vector.load %arg3[%c8, %c0_37, %c0_38] : memref<9x8x8xbf16, #tpu.memory_space<vmem>>, vector<1x8x8xbf16>
    %67 = vector.shape_cast %66 : vector<1x8x8xbf16> to vector<8x8xbf16>
    %cst_39 = arith.constant dense<0.000000e+00> : vector<8x768xf32>
    %68 = tpu.matmul %67, %65, %cst_39 {dimension_numbers = #tpu.dot_dimension_numbers<[1], [0], [0], [1], [0, 0, 1, 1], [], []>} : vector<8x8xbf16>, vector<8x768xbf16>, vector<8x768xf32> -> vector<8x768xf32>
    %69 = arith.addf %63, %68 : vector<8x768xf32>
    %c0_40 = arith.constant 0 : index
    %c0_41 = arith.constant 0 : index
    %70 = vector.load %arg8[%c0_40, %c0_41] : memref<8x768xf32, #tpu.memory_space<vmem>>, vector<8x768xf32>
    %71 = arith.addf %70, %69 : vector<8x768xf32>
    %cst_42 = arith.constant 1.000000e+00 : f32
    %72 = vector.broadcast %cst_42 : f32 to vector<8x768xf32>
    %73 = arith.cmpf oge, %71, %72 : vector<8x768xf32>
    %c0_43 = arith.constant 0 : index
    %c0_44 = arith.constant 0 : index
    %74 = vector.load %arg5[%c0_43, %c0_44] : memref<1x768xf32, #tpu.memory_space<vmem>>, vector<1x768xf32>
    %cst_45 = arith.constant 0.000000e+00 : f32
    %75 = vector.shape_cast %74 : vector<1x768xf32> to vector<1x768xf32>
    %76 = vector.broadcast %75 : vector<1x768xf32> to vector<8x768xf32>
    %77 = vector.broadcast %cst_45 : f32 to vector<8x768xf32>
    %78 = arith.select %73, %76, %77 : vector<8x768xi1>, vector<8x768xf32>
    %79 = arith.truncf %78 : vector<8x768xf32> to vector<8x768xbf16>
    %c0_46 = arith.constant 0 : index
    %c0_47 = arith.constant 0 : index
    %c0_48 = arith.constant 0 : index
    %80 = vector.load %arg6[%c0_46, %c0_47, %c0_48] : memref<1x8x768xbf16, #tpu.memory_space<vmem>>, vector<1x8x768xbf16>
    %81 = vector.shape_cast %80 : vector<1x8x768xbf16> to vector<8x768xbf16>
    %82 = vector.shape_cast %79 : vector<8x768xbf16> to vector<1x8x768xbf16>
    tpu.vector_store %arg6[%c0_46, %c0_47, %c0_48], %82 {strides = array<i32>} : memref<1x8x768xbf16, #tpu.memory_space<vmem>>, vector<1x8x768xbf16>,
    %cst_49 = arith.constant 0.000000e+00 : f32
    %83 = vector.broadcast %cst_49 : f32 to vector<8x768xf32>
    %84 = arith.select %73, %83, %71 : vector<8x768xi1>, vector<8x768xf32>
    %c0_50 = arith.constant 0 : index
    %c0_51 = arith.constant 0 : index
    %85 = vector.load %arg8[%c0_50, %c0_51] : memref<8x768xf32, #tpu.memory_space<vmem>>, vector<8x768xf32>
    tpu.vector_store %arg8[%c0_50, %c0_51], %84 {strides = array<i32>} : memref<8x768xf32, #tpu.memory_space<vmem>>, vector<8x768xf32>,
    return
  }
  func.func @transform_0(%arg0: i32, %arg1: i32) -> (i32, i32, i32) {
    %c0_i32 = arith.constant 0 : i32
    %c0_i32_0 = arith.constant 0 : i32
    return %arg1, %c0_i32, %arg0 : i32, i32, i32
  }
  func.func @transform_1(%arg0: i32, %arg1: i32) -> (i32, i32, i32) {
    %c0_i32 = arith.constant 0 : i32
    %c0_i32_0 = arith.constant 0 : i32
    %c0_i32_1 = arith.constant 0 : i32
    %c0_i32_2 = arith.constant 0 : i32
    return %c0_i32, %c0_i32_0, %c0_i32_1 : i32, i32, i32
  }
  func.func @transform_2(%arg0: i32, %arg1: i32) -> (i32, i32) {
    %c0_i32 = arith.constant 0 : i32
    %c0_i32_0 = arith.constant 0 : i32
    %c0_i32_1 = arith.constant 0 : i32
    return %c0_i32, %c0_i32_0 : i32, i32
  }
  func.func @transform_3(%arg0: i32, %arg1: i32) -> (i32, i32) {
    %c0_i32 = arith.constant 0 : i32
    %c0_i32_0 = arith.constant 0 : i32
    return %c0_i32, %arg0 : i32, i32
  }
  func.func @transform_4(%arg0: i32, %arg1: i32) -> (i32, i32, i32) {
    %c0_i32 = arith.constant 0 : i32
    %c0_i32_0 = arith.constant 0 : i32
    return %arg1, %c0_i32, %arg0 : i32, i32, i32
  }
}

</mosaic_0001>

<llo_original>
// kernel: tpu_custom_call.1
$region0: #{tpu_custom_call.1}
  #allocation0 [shape = 'u32[]', space=smem, size = 0x4, offset = 0x4, fixed_abs, tag = 'smem constant byte address 0x4 - core index']
  #allocation1 [shape = 'u32[72,128]{1,0:T(1,128)}', space=vmem, size = 0x9000, scoped, tag = 'internal scratch']
  #allocation2 [shape = 'f32[8,768]{1,0:T(8,128)}', space=vmem, size = 0x6000, scoped, tag = 'scratch operand']
  #allocation3 [shape = 'f32[8,768]{1,0:T(8,128)}', space=vmem, size = 0x6000, scoped, tag = 'scratch operand']
  %s0 = inlined_call_operand.hbm [shape: f32[4,8,768], index: 0, kind: input, shape index: {}]
  %s1 = inlined_call_operand.vmem [shape: bf16[9,8,8], index: 1, kind: input, shape index: {}]
  %s2 = inlined_call_operand.vmem [shape: f32[8,1], index: 2, kind: input, shape index: {}]
  %s3 = inlined_call_operand.vmem [shape: f32[1,768], index: 3, kind: input, shape index: {}]
  %s4 = inlined_call_operand.hbm [shape: bf16[4,8,768], index: 4, kind: output, shape index: {}]
  %s5 = sld [smem:[#allocation0]]
  $region57: #{tpu_custom_call.1} parent=0
    _
  %s7 = ssub.s32 1, %s5
  %s8 = scalar_select 0, %s7, %s5
  $region1: #{tpu_custom_call.1} parent=0
    #allocation4 [shape = 'u8[49152]{0}', space=vmem, size = 0xc000, scoped, tag = 'input window, operand 0']
    #allocation5 [shape = 's32[2]{0}', space=sflag, size = 0x8, scoped, tag = 'scoped memory for tpu_custom_call.1']
    #allocation6 [shape = 's32[2]{0}', space=sflag, size = 0x8, scoped, tag = 'scoped memory for tpu_custom_call.1']
    #allocation7 [shape = 'u8[24576]{0}', space=vmem, size = 0x6000, scoped, tag = 'output window, operand 0']
    %9 = vsyncpa [#allocation5], 0
    %s10 = scalar_lea.sflag [#allocation5], 1
    %11 = vsyncpa %s10, 0
    %12 = vsyncpa [#allocation6], 0
    %s13 = scalar_lea.sflag [#allocation6], 1
    %14 = vsyncpa %s13, 0
    loop: start=0, step=1, limit=6
    $region2: #{tpu_custom_call.1} parent=1 // loop_pre_header
      _
    $region3: #{tpu_custom_call.1} parent=1 // loop_header
      %s16 = sphi 0, %s20
      %p17 = scmp.ge.s32.totalorder %s16, 6
      %s23 = sphi 0, %s35
      %s24 = sphi 0, %s31
      %s25 = sphi 0, %s23
      %s26 = sphi 0, %s24
      %s27 = sphi 0, %s25
      %s28 = sphi 0, %s26
      %s40 = sphi 0, %s42
      %s43 = sphi 0, %s40
      %s44 = sphi 0, %s43
      %s60 = sphi 0, %s44
      %s64 = sphi 0, %s64
      %s66 = sphi 0, %s64
      %s67 = sphi 0, %s66
      %s81 = sphi 0, %s67
      %s85 = sphi 0, %s85
      %s87 = sphi 0, %s85
      %s88 = sphi 0, %s87
      %s102 = sphi 0, %s88
      %s108 = sphi 0, %s110
      %s111 = sphi 0, %s108
      %s112 = sphi 0, %s111
      %s128 = sphi 0, %s112
      %s136 = sphi 0, %s138
      %s139 = sphi 0, %s136
      %s140 = sphi 0, %s139
      %s156 = sphi 0, %s140
    $region4: #{tpu_custom_call.1} parent=1 // loop_header_branch
      %19 = sbr.rel (%p17) target = $region8
    $region5: #{tpu_custom_call.1} parent=1 // loop_body
      %s21 = ssub.s32 %s16, 1
      %s22 = ssub.s32 %s16, 2
      %s29 = sadd.s32 1, %s24
      %p30 = scmp.ge.s32.totalorder %s29, 4
      %s31 = scalar_select %p30, 0, %s29
      %s32 = sadd.s32 1, %s23
      %s33 = scalar_select %p30, %s32, %s23
      %p34 = scmp.ge.s32.totalorder %s33, 1
      %s35 = scalar_select %p34, 0, %s33
      %s36 = ssub.s32 %s24, %s31
      %s37 = ssub.s32 %s23, %s35
      %s38 = sor.u32 %s36, %s37
      %p39 = scmp.eq.s32.totalorder %s38, 0
      %s41 = sadd.s32 %s40, 1
      %s42 = scalar_select %p39, %s40, %s41
      %p45 = pneg %p39
      %p46 = scmp.eq.s32.totalorder %s16, 3
      %p47 = por %p45, %p46
      %p48 = scmp.ne.s32.totalorder %s40, %s43
      %p49 = scmp.eq.s32.totalorder %s16, 0
      %p50 = por %p48, %p49
      %p51 = scmp.ne.s32.totalorder %s40, %s43
      %p52 = scmp.eq.s32.totalorder %s21, 3
      %p53 = por %p51, %p52
      %p54 = scmp.ne.s32.totalorder %s43, %s44
      %p55 = scmp.eq.s32.totalorder %s21, 0
      %p56 = por %p54, %p55
      %p57 = scmp.ne.s32.totalorder %s43, %s44
      %p58 = scmp.eq.s32.totalorder %s22, 3
      %p59 = por %p57, %p58
      %p61 = scmp.ne.s32.totalorder %s44, %s60
      %p62 = scmp.eq.s32.totalorder %s22, 0
      %p63 = por %p61, %p62
      %s65 = sadd.s32 %s64, 1
      %p68 = scmp.eq.s32.totalorder %s16, 3
      %p69 = scmp.ne.s32.totalorder %s64, %s66
      %p70 = scmp.eq.s32.totalorder %s16, 0
      %p71 = por %p69, %p70
      %p72 = scmp.ne.s32.totalorder %s64, %s66
      %p73 = scmp.eq.s32.totalorder %s21, 3
      %p74 = por %p72, %p73
      %p75 = scmp.ne.s32.totalorder %s66, %s67
      %p76 = scmp.eq.s32.totalorder %s21, 0
      %p77 = por %p75, %p76
      %p78 = scmp.ne.s32.totalorder %s66, %s67
      %p79 = scmp.eq.s32.totalorder %s22, 3
      %p80 = por %p78, %p79
      %p82 = scmp.ne.s32.totalorder %s67, %s81
      %p83 = scmp.eq.s32.totalorder %s22, 0
      %p84 = por %p82, %p83
      %s86 = sadd.s32 %s85, 1
      %p89 = scmp.eq.s32.totalorder %s16, 3
      %p90 = scmp.ne.s32.totalorder %s85, %s87
      %p91 = scmp.eq.s32.totalorder %s16, 0
      %p92 = por %p90, %p91
      %p93 = scmp.ne.s32.totalorder %s85, %s87
      %p94 = scmp.eq.s32.totalorder %s21, 3
      %p95 = por %p93, %p94
      %p96 = scmp.ne.s32.totalorder %s87, %s88
      %p97 = scmp.eq.s32.totalorder %s21, 0
      %p98 = por %p96, %p97
      %p99 = scmp.ne.s32.totalorder %s87, %s88
      %p100 = scmp.eq.s32.totalorder %s22, 3
      %p101 = por %p99, %p100
      %p103 = scmp.ne.s32.totalorder %s88, %s102
      %p104 = scmp.eq.s32.totalorder %s22, 0
      %p105 = por %p103, %p104
      %s106 = ssub.s32 %s23, %s35
      %p107 = scmp.eq.s32.totalorder %s106, 0
      %s109 = sadd.s32 %s108, 1
      %s110 = scalar_select %p107, %s108, %s109
      %p113 = pneg %p107
      %p114 = scmp.eq.s32.totalorder %s16, 3
      %p115 = por %p113, %p114
      %p116 = scmp.ne.s32.totalorder %s108, %s111
      %p117 = scmp.eq.s32.totalorder %s16, 0
      %p118 = por %p116, %p117
      %p119 = scmp.ne.s32.totalorder %s108, %s111
      %p120 = scmp.eq.s32.totalorder %s21, 3
      %p121 = por %p119, %p120
      %p122 = scmp.ne.s32.totalorder %s111, %s112
      %p123 = scmp.eq.s32.totalorder %s21, 0
      %p124 = por %p122, %p123
      %p125 = scmp.ne.s32.totalorder %s111, %s112
      %p126 = scmp.eq.s32.totalorder %s22, 3
      %p127 = por %p125, %p126
      %p129 = scmp.ne.s32.totalorder %s112, %s128
      %p130 = scmp.eq.s32.totalorder %s22, 0
      %p131 = por %p129, %p130
      %s132 = ssub.s32 %s24, %s31
      %s133 = ssub.s32 %s23, %s35
      %s134 = sor.u32 %s132, %s133
      %p135 = scmp.eq.s32.totalorder %s134, 0
      %s137 = sadd.s32 %s136, 1
      %s138 = scalar_select %p135, %s136, %s137
      %p141 = pneg %p135
      %p142 = scmp.eq.s32.totalorder %s16, 3
      %p143 = por %p141, %p142
      %p144 = scmp.ne.s32.totalorder %s136, %s139
      %p145 = scmp.eq.s32.totalorder %s16, 0
      %p146 = por %p144, %p145
      %p147 = scmp.ne.s32.totalorder %s136, %s139
      %p148 = scmp.eq.s32.totalorder %s21, 3
      %p149 = por %p147, %p148
      %p150 = scmp.ne.s32.totalorder %s139, %s140
      %p151 = scmp.eq.s32.totalorder %s21, 0
      %p152 = por %p150, %p151
      %p153 = scmp.ne.s32.totalorder %s139, %s140
      %p154 = scmp.eq.s32.totalorder %s22, 3
      %p155 = por %p153, %p154
      %p157 = scmp.ne.s32.totalorder %s140, %s156
      %p158 = scmp.eq.s32.totalorder %s22, 0
      %p159 = por %p157, %p158
      %p160 = scmp.le.s32.totalorder 1, %s16
      %p161 = scmp.lt.s32.totalorder %s16, 5
      %p162 = pnand %p160, %p161
      %p163 = pneg %p162
      // Predicated region
      $region9: #{tpu_custom_call.1} parent=5 // pred_check
        _
      $region10: #{tpu_custom_call.1} parent=5 // pred_check_branch
        %165 = sbr.rel (%p162) target = $region12
      $region11: #{tpu_custom_call.1} parent=5 // pred_region
        %s166 = ssub.s32 %s16, 1
        // Predicated region
        $region13: #{tpu_custom_call.1} parent=11 // pred_check
          %p167 = pneg %p77
        $region14: #{tpu_custom_call.1} parent=11 // pred_check_branch
          %169 = sbr.rel (%p167) target = $region16
        $region15: #{tpu_custom_call.1} parent=11 // pred_region
          _
        $region16: #{tpu_custom_call.1} parent=11 // pred_fallthru
          _
        // Predicated region
        $region17: #{tpu_custom_call.1} parent=11 // pred_check
          %p170 = pneg %p98
        $region18: #{tpu_custom_call.1} parent=11 // pred_check_branch
          %172 = sbr.rel (%p170) target = $region20
        $region19: #{tpu_custom_call.1} parent=11 // pred_region
          _
        $region20: #{tpu_custom_call.1} parent=11 // pred_fallthru
          _
        // Predicated region
        $region21: #{tpu_custom_call.1} parent=11 // pred_check
          %p173 = pneg %p124
        $region22: #{tpu_custom_call.1} parent=11 // pred_check_branch
          %175 = sbr.rel (%p173) target = $region24
        $region23: #{tpu_custom_call.1} parent=11 // pred_region
          %s176 = smul.u32 6, %s25
          %p177 = scmp.lt.s32.totalorder %s176, 5
          %s178 = scalar_select %p177, %s176, 5
          %s179 = scalar_lea.vmem %s3, %s178
          %s180 = smul.u32 6, %s25
        $region24: #{tpu_custom_call.1} parent=11 // pred_fallthru
          _
      $region12: #{tpu_custom_call.1} parent=5 // pred_fallthru
        _
      %p181 = scmp.lt.s32.totalorder %s16, 4
      // Predicated region
      $region25: #{tpu_custom_call.1} parent=5 // pred_check
        %p182 = pneg %p181
      $region26: #{tpu_custom_call.1} parent=5 // pred_check_branch
        %184 = sbr.rel (%p182) target = $region28
      $region27: #{tpu_custom_call.1} parent=5 // pred_region
        // Predicated region
        $region29: #{tpu_custom_call.1} parent=27 // pred_check
          %p185 = pneg %p50
        $region30: #{tpu_custom_call.1} parent=27 // pred_check_branch
          %187 = sbr.rel (%p185) target = $region32
        $region31: #{tpu_custom_call.1} parent=27 // pred_region
          %s188 = sand.u32 %s40, 1
          %s189 = scalar_lea.sflag [#allocation5], %s188
          %s190 = sand.u32 %s40, 1
          %s191 = smul.addr %s190, 48
          %s192 = scalar_lea.vmem [#allocation4], %s191
          %s193 = smul.u32 6, %s23
          %195 = vsyncadd %s189, 0
          %s196 = smul.addr %s24, 6
          %s197 = sadd.s32 %s193, %s196
          %s198 = smul.addr %s197, 8
          %s199 = scalar_lea.hbm %s0, %s198
          %s201 = sshll.u32 %s199, 4
          %s202 = int_to_ptr.hbm [resolvable:$true] %s201
          %s203 = sshll.u32 %s192, 4
          %s204 = int_to_ptr.vmem [resolvable:$true] %s203
          %206 = dma.hbm_to_vmem [thread:$0]  %s202, 768, %s204, %s189
        $region32: #{tpu_custom_call.1} parent=27 // pred_fallthru
          _
      $region28: #{tpu_custom_call.1} parent=5 // pred_fallthru
        _
      %p207 = scmp.le.s32.totalorder 1, %s16
      %p208 = scmp.lt.s32.totalorder %s16, 5
      %p209 = pnand %p207, %p208
      %p210 = pneg %p209
      // Predicated region
      $region33: #{tpu_custom_call.1} parent=5 // pred_check
        _
      $region34: #{tpu_custom_call.1} parent=5 // pred_check_branch
        %212 = sbr.rel (%p209) target = $region36
      $region35: #{tpu_custom_call.1} parent=5 // pred_region
        %s213 = ssub.s32 %s16, 1
        %s214 = sand.u32 %s43, 1
        %s215 = scalar_lea.sflag [#allocation5], %s214
        %s216 = sand.u32 %s43, 1
        %s217 = smul.addr %s216, 48
        %s218 = scalar_lea.vmem [#allocation4], %s217
        // Predicated region
        $region37: #{tpu_custom_call.1} parent=35 // pred_check
          %p219 = pneg %p56
        $region38: #{tpu_custom_call.1} parent=35 // pred_check_branch
          %221 = sbr.rel (%p219) target = $region40
        $region39: #{tpu_custom_call.1} parent=35 // pred_region
          %223 = dma.done %s215, 768
        $region40: #{tpu_custom_call.1} parent=35 // pred_fallthru
          _
        %s224 = sand.u32 %s43, 1
        %s225 = scalar_lea.sflag [#allocation5], %s224
        %s226 = sand.u32 %s43, 1
        %s227 = smul.addr %s226, 48
        %s228 = scalar_lea.vmem [#allocation4], %s227
        %p229 = pneg %p56
        %p230 = pneg %p53
        %p231 = pneg %p77
        %p232 = pneg %p74
        %p233 = pneg %p98
        %p234 = pneg %p95
        %s235 = smul.u32 6, %s25
        %p236 = scmp.lt.s32.totalorder %s235, 5
        %s237 = scalar_select %p236, %s235, 5
        %s238 = scalar_lea.vmem %s3, %s237
        %p239 = pneg %p124
        %p240 = pneg %p121
        %p241 = pneg %p152
        %p242 = pneg %p149
        %s243 = sand.u32 %s139, 1
        %s244 = scalar_lea.sflag [#allocation6], %s243
        %s245 = sand.u32 %s139, 1
        %s246 = smul.addr %s245, 24
        %s247 = scalar_lea.vmem [#allocation7], %s246
        %s248 = smul.u32 6, %s25
        %s249 = smul.u32 6, %s25
        %p250 = scmp.lt.s32.totalorder %s249, 5
        %s251 = scalar_select %p250, %s249, 5
        %s252 = scalar_lea.vmem %s3, %s251
        %s253 = smul.u32 6, %s25
        %s254 = smul.u32 6, %s25
        %p256 = scmp.eq.s32.totalorder %s26, 0
        // Predicated region
        $region41: #{tpu_custom_call.1} parent=35 // pred_check
          %p257 = pneg %p256
        $region42: #{tpu_custom_call.1} parent=35 // pred_check_branch
          %259 = sbr.rel (%p257) target = $region44
        $region43: #{tpu_custom_call.1} parent=35 // pred_region
          %260 = vst [vmem:[#allocation2] sm:$0xff] 0.0
          %261 = vst [vmem:[#allocation2 + $0x8] sm:$0xff] 0.0
          %262 = vst [vmem:[#allocation2 + $0x10] sm:$0xff] 0.0
          %263 = vst [vmem:[#allocation2 + $0x18] sm:$0xff] 0.0
          %264 = vst [vmem:[#allocation2 + $0x20] sm:$0xff] 0.0
          %265 = vst [vmem:[#allocation2 + $0x28] sm:$0xff] 0.0
          %266 = vst [vmem:[#allocation3] sm:$0xff] 0.0
          %267 = vst [vmem:[#allocation3 + $0x8] sm:$0xff] 0.0
          %268 = vst [vmem:[#allocation3 + $0x10] sm:$0xff] 0.0
          %269 = vst [vmem:[#allocation3 + $0x18] sm:$0xff] 0.0
          %270 = vst [vmem:[#allocation3 + $0x20] sm:$0xff] 0.0
          %271 = vst [vmem:[#allocation3 + $0x28] sm:$0xff] 0.0
        $region44: #{tpu_custom_call.1} parent=35 // pred_fallthru
          _
        %v272 = vld [vmem:[#allocation2] sm:$0xff]
        %v273 = vld [vmem:[#allocation2 + $0x8] sm:$0xff]
        %v274 = vld [vmem:[#allocation2 + $0x10] sm:$0xff]
        %v275 = vld [vmem:[#allocation2 + $0x18] sm:$0xff]
        %v276 = vld [vmem:[#allocation2 + $0x20] sm:$0xff]
        %v277 = vld [vmem:[#allocation2 + $0x28] sm:$0xff]
        %v278 = vld [vmem:[%s218] sm:$0xff]
        %v279 = vld [vmem:[%s218 + $0x8] sm:$0xff]
        %v280 = vld [vmem:[%s218 + $0x10] sm:$0xff]
        %v281 = vld [vmem:[%s218 + $0x18] sm:$0xff]
        %v282 = vld [vmem:[%s218 + $0x20] sm:$0xff]
        %v283 = vld [vmem:[%s218 + $0x28] sm:$0xff]
        %v284 = vadd.f32 %v272, %v278
        %v285 = vadd.f32 %v273, %v279
        %v286 = vadd.f32 %v274, %v280
        %v287 = vadd.f32 %v275, %v281
        %v288 = vadd.f32 %v276, %v282
        %v289 = vadd.f32 %v277, %v283
        %vm290 = vcmp.ge.f32.partialorder %v284, 1.0
        %vm291 = vcmp.ge.f32.partialorder %v285, 1.0
        %vm292 = vcmp.ge.f32.partialorder %v286, 1.0
        %vm293 = vcmp.ge.f32.partialorder %v287, 1.0
        %vm294 = vcmp.ge.f32.partialorder %v288, 1.0
        %vm295 = vcmp.ge.f32.partialorder %v289, 1.0
        %v296 = vsel %vm290, 1.0, 0.0
        %v297 = vsel %vm291, 1.0, 0.0
        %v298 = vsel %vm292, 1.0, 0.0
        %v299 = vsel %vm293, 1.0, 0.0
        %v300 = vsel %vm294, 1.0, 0.0
        %v301 = vsel %vm295, 1.0, 0.0
        %v302 = vsel %vm290, 0.0, %v284
        %v303 = vsel %vm291, 0.0, %v285
        %v304 = vsel %vm292, 0.0, %v286
        %v305 = vsel %vm293, 0.0, %v287
        %v306 = vsel %vm294, 0.0, %v288
        %v307 = vsel %vm295, 0.0, %v289
        %308 = vst [vmem:[#allocation2] sm:$0xff] %v302
        %309 = vst [vmem:[#allocation2 + $0x8] sm:$0xff] %v303
        %310 = vst [vmem:[#allocation2 + $0x10] sm:$0xff] %v304
        %311 = vst [vmem:[#allocation2 + $0x18] sm:$0xff] %v305
        %312 = vst [vmem:[#allocation2 + $0x20] sm:$0xff] %v306
        %313 = vst [vmem:[#allocation2 + $0x28] sm:$0xff] %v307
        %v314 = vld [vmem:[%s2] sm:$0xff]
        %315 = vrot.lane.b32.xlu0 %v296, 19
        %v316 = vpop.permute.xlu0 %315
        %317 = vrot.lane.b32.xlu0 %v297, 19
        %v318 = vpop.permute.xlu0 %317
        %319 = vrot.lane.b32.xlu0 %v298, 19
        %v320 = vpop.permute.xlu0 %319
        %321 = vrot.lane.b32.xlu0 %v299, 19
        %v322 = vpop.permute.xlu0 %321
        %323 = vrot.lane.b32.xlu0 %v300, 19
        %v324 = vpop.permute.xlu0 %323
        %325 = vrot.lane.b32.xlu0 %v301, 19
        %v326 = vpop.permute.xlu0 %325
        %v327 = vlaneseq
        %v328 = vand.u32 %v327, 127
        %vm329 = vcmp.lt.s32.totalorder %v328, 19
        %v330 = vsel %vm329, %v324, %v326
        %v331 = vsel %vm329, %v322, %v324
        %v332 = vsel %vm329, %v320, %v322
        %v333 = vsel %vm329, %v318, %v320
        %v334 = vsel %vm329, %v316, %v318
        %v335 = vsel %vm329, %v326, %v316
        %v336 = vpack.c.bf16 %v335, %v335
        %v337 = vpack.c.bf16 %v334, %v334
        %v338 = vpack.c.bf16 %v333, %v333
        %v339 = vpack.c.bf16 %v332, %v332
        %v340 = vpack.c.bf16 %v331, %v331
        %v341 = vpack.c.bf16 %v330, %v330
        %v342 = vld [vmem:[%s1] sm:$0xf]
        %vm343 = vcmask 64512
        %v345 = vsel %vm343, %v342, 0
        %vm347 = vcmask 1043456
        %v349 = vsel %vm347, %v336, 0
        %v352 = vsel %vm347, %v337, 0
        %v355 = vsel %vm347, %v338, 0
        %v358 = vsel %vm347, %v339, 0
        %v361 = vsel %vm347, %v340, 0
        %v364 = vsel %vm347, %v341, 0
        %366 = vmatpush.bf16.msra.mxu0 0
        %367 = vmatpush.bf16.msra.mxu0 0
        %368 = vmatpush.bf16.msra.mxu0 0
        %369 = vmatpush.bf16.msra.mxu0 0
        %370 = vmatpush.bf16.msra.mxu0 0
        %371 = vmatpush.bf16.msra.mxu0 0
        %372 = vmatpush.bf16.msra.mxu0 0
        %373 = vmatpush.bf16.msra.mxu0 %v349
        %374 = vmatmul.bf16.gmra.mxu0 %v345
        %v375 = vpop.f32.mrf.mxu0
        %v376 = vadd.f32 0.0, %v375
        %v377 = vpop.f32.mrf.mxu0
        %378 = vdwg.mxu0
        %379 = vmatpush.bf16.msra.mxu0 0
        %380 = vmatpush.bf16.msra.mxu0 0
        %381 = vmatpush.bf16.msra.mxu0 0
        %382 = vmatpush.bf16.msra.mxu0 0
        %383 = vmatpush.bf16.msra.mxu0 0
        %384 = vmatpush.bf16.msra.mxu0 0
        %385 = vmatpush.bf16.msra.mxu0 0
        %386 = vmatpush.bf16.msra.mxu0 %v352
        %387 = vmatmul.bf16.gmra.mxu0 %v345
        %v388 = vpop.f32.mrf.mxu0
        %v389 = vadd.f32 0.0, %v388
        %v390 = vpop.f32.mrf.mxu0
        %391 = vdwg.mxu0
        %392 = vmatpush.bf16.msra.mxu0 0
        %393 = vmatpush.bf16.msra.mxu0 0
        %394 = vmatpush.bf16.msra.mxu0 0
        %395 = vmatpush.bf16.msra.mxu0 0
        %396 = vmatpush.bf16.msra.mxu0 0
        %397 = vmatpush.bf16.msra.mxu0 0
        %398 = vmatpush.bf16.msra.mxu0 0
        %399 = vmatpush.bf16.msra.mxu0 %v355
        %400 = vmatmul.bf16.gmra.mxu0 %v345
        %v401 = vpop.f32.mrf.mxu0
        %v402 = vadd.f32 0.0, %v401
        %v403 = vpop.f32.mrf.mxu0
        %404 = vdwg.mxu0
        %405 = vmatpush.bf16.msra.mxu0 0
        %406 = vmatpush.bf16.msra.mxu0 0
        %407 = vmatpush.bf16.msra.mxu0 0
        %408 = vmatpush.bf16.msra.mxu0 0
        %409 = vmatpush.bf16.msra.mxu0 0
        %410 = vmatpush.bf16.msra.mxu0 0
        %411 = vmatpush.bf16.msra.mxu0 0
        %412 = vmatpush.bf16.msra.mxu0 %v358
        %413 = vmatmul.bf16.gmra.mxu0 %v345
        %v414 = vpop.f32.mrf.mxu0
        %v415 = vadd.f32 0.0, %v414
        %v416 = vpop.f32.mrf.mxu0
        %417 = vdwg.mxu0
        %418 = vmatpush.bf16.msra.mxu0 0
        %419 = vmatpush.bf16.msra.mxu0 0
        %420 = vmatpush.bf16.msra.mxu0 0
        %421 = vmatpush.bf16.msra.mxu0 0
        %422 = vmatpush.bf16.msra.mxu0 0
        %423 = vmatpush.bf16.msra.mxu0 0
        %424 = vmatpush.bf16.msra.mxu0 0
        %425 = vmatpush.bf16.msra.mxu0 %v361
        %426 = vmatmul.bf16.gmra.mxu0 %v345
        %v427 = vpop.f32.mrf.mxu0
        %v428 = vadd.f32 0.0, %v427
        %v429 = vpop.f32.mrf.mxu0
        %430 = vdwg.mxu0
        %431 = vmatpush.bf16.msra.mxu0 0
        %432 = vmatpush.bf16.msra.mxu0 0
        %433 = vmatpush.bf16.msra.mxu0 0
        %434 = vmatpush.bf16.msra.mxu0 0
        %435 = vmatpush.bf16.msra.mxu0 0
        %436 = vmatpush.bf16.msra.mxu0 0
        %437 = vmatpush.bf16.msra.mxu0 0
        %438 = vmatpush.bf16.msra.mxu0 %v364
        %439 = vmatmul.bf16.gmra.mxu0 %v345
        %v440 = vpop.f32.mrf.mxu0
        %v441 = vadd.f32 0.0, %v440
        %v442 = vpop.f32.mrf.mxu0
        %443 = vdwg.mxu0
        %445 = vset.pattern.permute.xlu0 0
        %446 = vperm.xlu0 %445, %v314
        %v447 = vpop.permute.xlu0 %446
        %v449 = vadd.f32 %v447, %v376
        %v450 = vadd.f32 %v447, %v389
        %v451 = vadd.f32 %v447, %v402
        %v452 = vadd.f32 %v447, %v415
        %v453 = vadd.f32 %v447, %v428
        %v454 = vadd.f32 %v447, %v441
        %455 = vrot.lane.b32.xlu0 %v296, 18
        %v456 = vpop.permute.xlu0 %455
        %457 = vrot.lane.b32.xlu0 %v297, 18
        %v458 = vpop.permute.xlu0 %457
        %459 = vrot.lane.b32.xlu0 %v298, 18
        %v460 = vpop.permute.xlu0 %459
        %461 = vrot.lane.b32.xlu0 %v299, 18
        %v462 = vpop.permute.xlu0 %461
        %463 = vrot.lane.b32.xlu0 %v300, 18
        %v464 = vpop.permute.xlu0 %463
        %465 = vrot.lane.b32.xlu0 %v301, 18
        %v466 = vpop.permute.xlu0 %465
        %vm467 = vcmp.lt.s32.totalorder %v328, 18
        %v468 = vsel %vm467, %v464, %v466
        %v469 = vsel %vm467, %v462, %v464
        %v470 = vsel %vm467, %v460, %v462
        %v471 = vsel %vm467, %v458, %v460
        %v472 = vsel %vm467, %v456, %v458
        %v473 = vsel %vm467, %v466, %v456
        %v474 = vpack.c.bf16 %v473, %v473
        %v475 = vpack.c.bf16 %v472, %v472
        %v476 = vpack.c.bf16 %v471, %v471
        %v477 = vpack.c.bf16 %v470, %v470
        %v478 = vpack.c.bf16 %v469, %v469
        %v479 = vpack.c.bf16 %v468, %v468
        %s480 = scalar_lea.vmem %s1, 4
        %v481 = vld [vmem:[%s480] sm:$0xf]
        %v483 = vsel %vm343, %v481, 0
        %v486 = vsel %vm347, %v474, 0
        %v489 = vsel %vm347, %v475, 0
        %v492 = vsel %vm347, %v476, 0
        %v495 = vsel %vm347, %v477, 0
        %v498 = vsel %vm347, %v478, 0
        %v501 = vsel %vm347, %v479, 0
        %503 = vmatpush.bf16.msra.mxu0 0
        %504 = vmatpush.bf16.msra.mxu0 0
        %505 = vmatpush.bf16.msra.mxu0 0
        %506 = vmatpush.bf16.msra.mxu0 0
        %507 = vmatpush.bf16.msra.mxu0 0
        %508 = vmatpush.bf16.msra.mxu0 0
        %509 = vmatpush.bf16.msra.mxu0 0
        %510 = vmatpush.bf16.msra.mxu0 %v486
        %511 = vmatmul.bf16.gmra.mxu0 %v483
        %v512 = vpop.f32.mrf.mxu0
        %v513 = vadd.f32 0.0, %v512
        %v514 = vpop.f32.mrf.mxu0
        %515 = vdwg.mxu0
        %516 = vmatpush.bf16.msra.mxu0 0
        %517 = vmatpush.bf16.msra.mxu0 0
        %518 = vmatpush.bf16.msra.mxu0 0
        %519 = vmatpush.bf16.msra.mxu0 0
        %520 = vmatpush.bf16.msra.mxu0 0
        %521 = vmatpush.bf16.msra.mxu0 0
        %522 = vmatpush.bf16.msra.mxu0 0
        %523 = vmatpush.bf16.msra.mxu0 %v489
        %524 = vmatmul.bf16.gmra.mxu0 %v483
        %v525 = vpop.f32.mrf.mxu0
        %v526 = vadd.f32 0.0, %v525
        %v527 = vpop.f32.mrf.mxu0
        %528 = vdwg.mxu0
        %529 = vmatpush.bf16.msra.mxu0 0
        %530 = vmatpush.bf16.msra.mxu0 0
        %531 = vmatpush.bf16.msra.mxu0 0
        %532 = vmatpush.bf16.msra.mxu0 0
        %533 = vmatpush.bf16.msra.mxu0 0
        %534 = vmatpush.bf16.msra.mxu0 0
        %535 = vmatpush.bf16.msra.mxu0 0
        %536 = vmatpush.bf16.msra.mxu0 %v492
        %537 = vmatmul.bf16.gmra.mxu0 %v483
        %v538 = vpop.f32.mrf.mxu0
        %v539 = vadd.f32 0.0, %v538
        %v540 = vpop.f32.mrf.mxu0
        %541 = vdwg.mxu0
        %542 = vmatpush.bf16.msra.mxu0 0
        %543 = vmatpush.bf16.msra.mxu0 0
        %544 = vmatpush.bf16.msra.mxu0 0
        %545 = vmatpush.bf16.msra.mxu0 0
        %546 = vmatpush.bf16.msra.mxu0 0
        %547 = vmatpush.bf16.msra.mxu0 0
        %548 = vmatpush.bf16.msra.mxu0 0
        %549 = vmatpush.bf16.msra.mxu0 %v495
        %550 = vmatmul.bf16.gmra.mxu0 %v483
        %v551 = vpop.f32.mrf.mxu0
        %v552 = vadd.f32 0.0, %v551
        %v553 = vpop.f32.mrf.mxu0
        %554 = vdwg.mxu0
        %555 = vmatpush.bf16.msra.mxu0 0
        %556 = vmatpush.bf16.msra.mxu0 0
        %557 = vmatpush.bf16.msra.mxu0 0
        %558 = vmatpush.bf16.msra.mxu0 0
        %559 = vmatpush.bf16.msra.mxu0 0
        %560 = vmatpush.bf16.msra.mxu0 0
        %561 = vmatpush.bf16.msra.mxu0 0
        %562 = vmatpush.bf16.msra.mxu0 %v498
        %563 = vmatmul.bf16.gmra.mxu0 %v483
        %v564 = vpop.f32.mrf.mxu0
        %v565 = vadd.f32 0.0, %v564
        %v566 = vpop.f32.mrf.mxu0
        %567 = vdwg.mxu0
        %568 = vmatpush.bf16.msra.mxu0 0
        %569 = vmatpush.bf16.msra.mxu0 0
        %570 = vmatpush.bf16.msra.mxu0 0
        %571 = vmatpush.bf16.msra.mxu0 0
        %572 = vmatpush.bf16.msra.mxu0 0
        %573 = vmatpush.bf16.msra.mxu0 0
        %574 = vmatpush.bf16.msra.mxu0 0
        %575 = vmatpush.bf16.msra.mxu0 %v501
        %576 = vmatmul.bf16.gmra.mxu0 %v483
        %v577 = vpop.f32.mrf.mxu0
        %v578 = vadd.f32 0.0, %v577
        %v579 = vpop.f32.mrf.mxu0
        %580 = vdwg.mxu0
        %v581 = vadd.f32 %v449, %v513
        %v582 = vadd.f32 %v450, %v526
        %v583 = vadd.f32 %v451, %v539
        %v584 = vadd.f32 %v452, %v552
        %v585 = vadd.f32 %v453, %v565
        %v586 = vadd.f32 %v454, %v578
        %587 = vrot.lane.b32.xlu0 %v296, 17
        %v588 = vpop.permute.xlu0 %587
        %589 = vrot.lane.b32.xlu0 %v297, 17
        %v590 = vpop.permute.xlu0 %589
        %591 = vrot.lane.b32.xlu0 %v298, 17
        %v592 = vpop.permute.xlu0 %591
        %593 = vrot.lane.b32.xlu0 %v299, 17
        %v594 = vpop.permute.xlu0 %593
        %595 = vrot.lane.b32.xlu0 %v300, 17
        %v596 = vpop.permute.xlu0 %595
        %597 = vrot.lane.b32.xlu0 %v301, 17
        %v598 = vpop.permute.xlu0 %597
        %vm599 = vcmp.lt.s32.totalorder %v328, 17
        %v600 = vsel %vm599, %v596, %v598
        %v601 = vsel %vm599, %v594, %v596
        %v602 = vsel %vm599, %v592, %v594
        %v603 = vsel %vm599, %v590, %v592
        %v604 = vsel %vm599, %v588, %v590
        %v605 = vsel %vm599, %v598, %v588
        %v606 = vpack.c.bf16 %v605, %v605
        %v607 = vpack.c.bf16 %v604, %v604
        %v608 = vpack.c.bf16 %v603, %v603
        %v609 = vpack.c.bf16 %v602, %v602
        %v610 = vpack.c.bf16 %v601, %v601
        %v611 = vpack.c.bf16 %v600, %v600
        %s612 = scalar_lea.vmem %s1, 8
        %v613 = vld [vmem:[%s612] sm:$0xf]
        %v615 = vsel %vm343, %v613, 0
        %v618 = vsel %vm347, %v606, 0
        %v621 = vsel %vm347, %v607, 0
        %v624 = vsel %vm347, %v608, 0
        %v627 = vsel %vm347, %v609, 0
        %v630 = vsel %vm347, %v610, 0
        %v633 = vsel %vm347, %v611, 0
        %635 = vmatpush.bf16.msra.mxu0 0
        %636 = vmatpush.bf16.msra.mxu0 0
        %637 = vmatpush.bf16.msra.mxu0 0
        %638 = vmatpush.bf16.msra.mxu0 0
        %639 = vmatpush.bf16.msra.mxu0 0
        %640 = vmatpush.bf16.msra.mxu0 0
        %641 = vmatpush.bf16.msra.mxu0 0
        %642 = vmatpush.bf16.msra.mxu0 %v618
        %643 = vmatmul.bf16.gmra.mxu0 %v615
        %v644 = vpop.f32.mrf.mxu0
        %v645 = vadd.f32 0.0, %v644
        %v646 = vpop.f32.mrf.mxu0
        %647 = vdwg.mxu0
        %648 = vmatpush.bf16.msra.mxu0 0
        %649 = vmatpush.bf16.msra.mxu0 0
        %650 = vmatpush.bf16.msra.mxu0 0
        %651 = vmatpush.bf16.msra.mxu0 0
        %652 = vmatpush.bf16.msra.mxu0 0
        %653 = vmatpush.bf16.msra.mxu0 0
        %654 = vmatpush.bf16.msra.mxu0 0
        %655 = vmatpush.bf16.msra.mxu0 %v621
        %656 = vmatmul.bf16.gmra.mxu0 %v615
        %v657 = vpop.f32.mrf.mxu0
        %v658 = vadd.f32 0.0, %v657
        %v659 = vpop.f32.mrf.mxu0
        %660 = vdwg.mxu0
        %661 = vmatpush.bf16.msra.mxu0 0
        %662 = vmatpush.bf16.msra.mxu0 0
        %663 = vmatpush.bf16.msra.mxu0 0
        %664 = vmatpush.bf16.msra.mxu0 0
        %665 = vmatpush.bf16.msra.mxu0 0
        %666 = vmatpush.bf16.msra.mxu0 0
        %667 = vmatpush.bf16.msra.mxu0 0
        %668 = vmatpush.bf16.msra.mxu0 %v624
        %669 = vmatmul.bf16.gmra.mxu0 %v615
        %v670 = vpop.f32.mrf.mxu0
        %v671 = vadd.f32 0.0, %v670
        %v672 = vpop.f32.mrf.mxu0
        %673 = vdwg.mxu0
        %674 = vmatpush.bf16.msra.mxu0 0
        %675 = vmatpush.bf16.msra.mxu0 0
        %676 = vmatpush.bf16.msra.mxu0 0
        %677 = vmatpush.bf16.msra.mxu0 0
        %678 = vmatpush.bf16.msra.mxu0 0
        %679 = vmatpush.bf16.msra.mxu0 0
        %680 = vmatpush.bf16.msra.mxu0 0
        %681 = vmatpush.bf16.msra.mxu0 %v627
        %682 = vmatmul.bf16.gmra.mxu0 %v615
        %v683 = vpop.f32.mrf.mxu0
        %v684 = vadd.f32 0.0, %v683
        %v685 = vpop.f32.mrf.mxu0
        %686 = vdwg.mxu0
        %687 = vmatpush.bf16.msra.mxu0 0
        %688 = vmatpush.bf16.msra.mxu0 0
        %689 = vmatpush.bf16.msra.mxu0 0
        %690 = vmatpush.bf16.msra.mxu0 0
        %691 = vmatpush.bf16.msra.mxu0 0
        %692 = vmatpush.bf16.msra.mxu0 0
        %693 = vmatpush.bf16.msra.mxu0 0
        %694 = vmatpush.bf16.msra.mxu0 %v630
        %695 = vmatmul.bf16.gmra.mxu0 %v615
        %v696 = vpop.f32.mrf.mxu0
        %v697 = vadd.f32 0.0, %v696
        %v698 = vpop.f32.mrf.mxu0
        %699 = vdwg.mxu0
        %700 = vmatpush.bf16.msra.mxu0 0
        %701 = vmatpush.bf16.msra.mxu0 0
        %702 = vmatpush.bf16.msra.mxu0 0
        %703 = vmatpush.bf16.msra.mxu0 0
        %704 = vmatpush.bf16.msra.mxu0 0
        %705 = vmatpush.bf16.msra.mxu0 0
        %706 = vmatpush.bf16.msra.mxu0 0
        %707 = vmatpush.bf16.msra.mxu0 %v633
        %708 = vmatmul.bf16.gmra.mxu0 %v615
        %v709 = vpop.f32.mrf.mxu0
        %v710 = vadd.f32 0.0, %v709
        %v711 = vpop.f32.mrf.mxu0
        %712 = vdwg.mxu0
        %v713 = vadd.f32 %v581, %v645
        %v714 = vadd.f32 %v582, %v658
        %v715 = vadd.f32 %v583, %v671
        %v716 = vadd.f32 %v584, %v684
        %v717 = vadd.f32 %v585, %v697
        %v718 = vadd.f32 %v586, %v710
        %719 = vrot.lane.b32.xlu0 %v296, 1
        %v720 = vpop.permute.xlu0 %719
        %721 = vrot.lane.b32.xlu0 %v297, 1
        %v722 = vpop.permute.xlu0 %721
        %723 = vrot.lane.b32.xlu0 %v298, 1
        %v724 = vpop.permute.xlu0 %723
        %725 = vrot.lane.b32.xlu0 %v299, 1
        %v726 = vpop.permute.xlu0 %725
        %727 = vrot.lane.b32.xlu0 %v300, 1
        %v728 = vpop.permute.xlu0 %727
        %729 = vrot.lane.b32.xlu0 %v301, 1
        %v730 = vpop.permute.xlu0 %729
        %vm731 = vcmp.lt.s32.totalorder %v328, 1
        %v732 = vsel %vm731, %v728, %v730
        %v733 = vsel %vm731, %v726, %v728
        %v734 = vsel %vm731, %v724, %v726
        %v735 = vsel %vm731, %v722, %v724
        %v736 = vsel %vm731, %v720, %v722
        %v737 = vsel %vm731, %v730, %v720
        %v738 = vpack.c.bf16 %v737, %v737
        %v739 = vpack.c.bf16 %v736, %v736
        %v740 = vpack.c.bf16 %v735, %v735
        %v741 = vpack.c.bf16 %v734, %v734
        %v742 = vpack.c.bf16 %v733, %v733
        %v743 = vpack.c.bf16 %v732, %v732
        %s744 = scalar_lea.vmem %s1, 12
        %v745 = vld [vmem:[%s744] sm:$0xf]
        %v747 = vsel %vm343, %v745, 0
        %v750 = vsel %vm347, %v738, 0
        %v753 = vsel %vm347, %v739, 0
        %v756 = vsel %vm347, %v740, 0
        %v759 = vsel %vm347, %v741, 0
        %v762 = vsel %vm347, %v742, 0
        %v765 = vsel %vm347, %v743, 0
        %767 = vmatpush.bf16.msra.mxu0 0
        %768 = vmatpush.bf16.msra.mxu0 0
        %769 = vmatpush.bf16.msra.mxu0 0
        %770 = vmatpush.bf16.msra.mxu0 0
        %771 = vmatpush.bf16.msra.mxu0 0
        %772 = vmatpush.bf16.msra.mxu0 0
        %773 = vmatpush.bf16.msra.mxu0 0
        %774 = vmatpush.bf16.msra.mxu0 %v750
        %775 = vmatmul.bf16.gmra.mxu0 %v747
        %v776 = vpop.f32.mrf.mxu0
        %v777 = vadd.f32 0.0, %v776
        %v778 = vpop.f32.mrf.mxu0
        %779 = vdwg.mxu0
        %780 = vmatpush.bf16.msra.mxu0 0
        %781 = vmatpush.bf16.msra.mxu0 0
        %782 = vmatpush.bf16.msra.mxu0 0
        %783 = vmatpush.bf16.msra.mxu0 0
        %784 = vmatpush.bf16.msra.mxu0 0
        %785 = vmatpush.bf16.msra.mxu0 0
        %786 = vmatpush.bf16.msra.mxu0 0
        %787 = vmatpush.bf16.msra.mxu0 %v753
        %788 = vmatmul.bf16.gmra.mxu0 %v747
        %v789 = vpop.f32.mrf.mxu0
        %v790 = vadd.f32 0.0, %v789
        %v791 = vpop.f32.mrf.mxu0
        %792 = vdwg.mxu0
        %793 = vmatpush.bf16.msra.mxu0 0
        %794 = vmatpush.bf16.msra.mxu0 0
        %795 = vmatpush.bf16.msra.mxu0 0
        %796 = vmatpush.bf16.msra.mxu0 0
        %797 = vmatpush.bf16.msra.mxu0 0
        %798 = vmatpush.bf16.msra.mxu0 0
        %799 = vmatpush.bf16.msra.mxu0 0
        %800 = vmatpush.bf16.msra.mxu0 %v756
        %801 = vmatmul.bf16.gmra.mxu0 %v747
        %v802 = vpop.f32.mrf.mxu0
        %v803 = vadd.f32 0.0, %v802
        %v804 = vpop.f32.mrf.mxu0
        %805 = vdwg.mxu0
        %806 = vmatpush.bf16.msra.mxu0 0
        %807 = vmatpush.bf16.msra.mxu0 0
        %808 = vmatpush.bf16.msra.mxu0 0
        %809 = vmatpush.bf16.msra.mxu0 0
        %810 = vmatpush.bf16.msra.mxu0 0
        %811 = vmatpush.bf16.msra.mxu0 0
        %812 = vmatpush.bf16.msra.mxu0 0
        %813 = vmatpush.bf16.msra.mxu0 %v759
        %814 = vmatmul.bf16.gmra.mxu0 %v747
        %v815 = vpop.f32.mrf.mxu0
        %v816 = vadd.f32 0.0, %v815
        %v817 = vpop.f32.mrf.mxu0
        %818 = vdwg.mxu0
        %819 = vmatpush.bf16.msra.mxu0 0
        %820 = vmatpush.bf16.msra.mxu0 0
        %821 = vmatpush.bf16.msra.mxu0 0
        %822 = vmatpush.bf16.msra.mxu0 0
        %823 = vmatpush.bf16.msra.mxu0 0
        %824 = vmatpush.bf16.msra.mxu0 0
        %825 = vmatpush.bf16.msra.mxu0 0
        %826 = vmatpush.bf16.msra.mxu0 %v762
        %827 = vmatmul.bf16.gmra.mxu0 %v747
        %v828 = vpop.f32.mrf.mxu0
        %v829 = vadd.f32 0.0, %v828
        %v830 = vpop.f32.mrf.mxu0
        %831 = vdwg.mxu0
        %832 = vmatpush.bf16.msra.mxu0 0
        %833 = vmatpush.bf16.msra.mxu0 0
        %834 = vmatpush.bf16.msra.mxu0 0
        %835 = vmatpush.bf16.msra.mxu0 0
        %836 = vmatpush.bf16.msra.mxu0 0
        %837 = vmatpush.bf16.msra.mxu0 0
        %838 = vmatpush.bf16.msra.mxu0 0
        %839 = vmatpush.bf16.msra.mxu0 %v765
        %840 = vmatmul.bf16.gmra.mxu0 %v747
        %v841 = vpop.f32.mrf.mxu0
        %v842 = vadd.f32 0.0, %v841
        %v843 = vpop.f32.mrf.mxu0
        %844 = vdwg.mxu0
        %v845 = vadd.f32 %v713, %v777
        %v846 = vadd.f32 %v714, %v790
        %v847 = vadd.f32 %v715, %v803
        %v848 = vadd.f32 %v716, %v816
        %v849 = vadd.f32 %v717, %v829
        %v850 = vadd.f32 %v718, %v842
        %v851 = vpack.c.bf16 %v296, %v296
        %v852 = vpack.c.bf16 %v297, %v297
        %v853 = vpack.c.bf16 %v298, %v298
        %v854 = vpack.c.bf16 %v299, %v299
        %v855 = vpack.c.bf16 %v300, %v300
        %v856 = vpack.c.bf16 %v301, %v301
        %s857 = scalar_lea.vmem %s1, 16
        %v858 = vld [vmem:[%s857] sm:$0xf]
        %v860 = vsel %vm343, %v858, 0
        %v863 = vsel %vm347, %v851, 0
        %v866 = vsel %vm347, %v852, 0
        %v869 = vsel %vm347, %v853, 0
        %v872 = vsel %vm347, %v854, 0
        %v875 = vsel %vm347, %v855, 0
        %v878 = vsel %vm347, %v856, 0
        %880 = vmatpush.bf16.msra.mxu0 0
        %881 = vmatpush.bf16.msra.mxu0 0
        %882 = vmatpush.bf16.msra.mxu0 0
        %883 = vmatpush.bf16.msra.mxu0 0
        %884 = vmatpush.bf16.msra.mxu0 0
        %885 = vmatpush.bf16.msra.mxu0 0
        %886 = vmatpush.bf16.msra.mxu0 0
        %887 = vmatpush.bf16.msra.mxu0 %v863
        %888 = vmatmul.bf16.gmra.mxu0 %v860
        %v889 = vpop.f32.mrf.mxu0
        %v890 = vadd.f32 0.0, %v889
        %v891 = vpop.f32.mrf.mxu0
        %892 = vdwg.mxu0
        %893 = vmatpush.bf16.msra.mxu0 0
        %894 = vmatpush.bf16.msra.mxu0 0
        %895 = vmatpush.bf16.msra.mxu0 0
        %896 = vmatpush.bf16.msra.mxu0 0
        %897 = vmatpush.bf16.msra.mxu0 0
        %898 = vmatpush.bf16.msra.mxu0 0
        %899 = vmatpush.bf16.msra.mxu0 0
        %900 = vmatpush.bf16.msra.mxu0 %v866
        %901 = vmatmul.bf16.gmra.mxu0 %v860
        %v902 = vpop.f32.mrf.mxu0
        %v903 = vadd.f32 0.0, %v902
        %v904 = vpop.f32.mrf.mxu0
        %905 = vdwg.mxu0
        %906 = vmatpush.bf16.msra.mxu0 0
        %907 = vmatpush.bf16.msra.mxu0 0
        %908 = vmatpush.bf16.msra.mxu0 0
        %909 = vmatpush.bf16.msra.mxu0 0
        %910 = vmatpush.bf16.msra.mxu0 0
        %911 = vmatpush.bf16.msra.mxu0 0
        %912 = vmatpush.bf16.msra.mxu0 0
        %913 = vmatpush.bf16.msra.mxu0 %v869
        %914 = vmatmul.bf16.gmra.mxu0 %v860
        %v915 = vpop.f32.mrf.mxu0
        %v916 = vadd.f32 0.0, %v915
        %v917 = vpop.f32.mrf.mxu0
        %918 = vdwg.mxu0
        %919 = vmatpush.bf16.msra.mxu0 0
        %920 = vmatpush.bf16.msra.mxu0 0
        %921 = vmatpush.bf16.msra.mxu0 0
        %922 = vmatpush.bf16.msra.mxu0 0
        %923 = vmatpush.bf16.msra.mxu0 0
        %924 = vmatpush.bf16.msra.mxu0 0
        %925 = vmatpush.bf16.msra.mxu0 0
        %926 = vmatpush.bf16.msra.mxu0 %v872
        %927 = vmatmul.bf16.gmra.mxu0 %v860
        %v928 = vpop.f32.mrf.mxu0
        %v929 = vadd.f32 0.0, %v928
        %v930 = vpop.f32.mrf.mxu0
        %931 = vdwg.mxu0
        %932 = vmatpush.bf16.msra.mxu0 0
        %933 = vmatpush.bf16.msra.mxu0 0
        %934 = vmatpush.bf16.msra.mxu0 0
        %935 = vmatpush.bf16.msra.mxu0 0
        %936 = vmatpush.bf16.msra.mxu0 0
        %937 = vmatpush.bf16.msra.mxu0 0
        %938 = vmatpush.bf16.msra.mxu0 0
        %939 = vmatpush.bf16.msra.mxu0 %v875
        %940 = vmatmul.bf16.gmra.mxu0 %v860
        %v941 = vpop.f32.mrf.mxu0
        %v942 = vadd.f32 0.0, %v941
        %v943 = vpop.f32.mrf.mxu0
        %944 = vdwg.mxu0
        %945 = vmatpush.bf16.msra.mxu0 0
        %946 = vmatpush.bf16.msra.mxu0 0
        %947 = vmatpush.bf16.msra.mxu0 0
        %948 = vmatpush.bf16.msra.mxu0 0
        %949 = vmatpush.bf16.msra.mxu0 0
        %950 = vmatpush.bf16.msra.mxu0 0
        %951 = vmatpush.bf16.msra.mxu0 0
        %952 = vmatpush.bf16.msra.mxu0 %v878
        %953 = vmatmul.bf16.gmra.mxu0 %v860
        %v954 = vpop.f32.mrf.mxu0
        %v955 = vadd.f32 0.0, %v954
        %v956 = vpop.f32.mrf.mxu0
        %957 = vdwg.mxu0
        %v958 = vadd.f32 %v845, %v890
        %v959 = vadd.f32 %v846, %v903
        %v960 = vadd.f32 %v847, %v916
        %v961 = vadd.f32 %v848, %v929
        %v962 = vadd.f32 %v849, %v942
        %v963 = vadd.f32 %v850, %v955
        %964 = vrot.lane.b32.xlu0 %v296, 127
        %v965 = vpop.permute.xlu0 %964
        %966 = vrot.lane.b32.xlu0 %v297, 127
        %v967 = vpop.permute.xlu0 %966
        %968 = vrot.lane.b32.xlu0 %v298, 127
        %v969 = vpop.permute.xlu0 %968
        %970 = vrot.lane.b32.xlu0 %v299, 127
        %v971 = vpop.permute.xlu0 %970
        %972 = vrot.lane.b32.xlu0 %v300, 127
        %v973 = vpop.permute.xlu0 %972
        %974 = vrot.lane.b32.xlu0 %v301, 127
        %v975 = vpop.permute.xlu0 %974
        %vm976 = vcmp.lt.s32.totalorder %v328, 127
        %v977 = vsel %vm976, %v973, %v975
        %v978 = vsel %vm976, %v971, %v973
        %v979 = vsel %vm976, %v969, %v971
        %v980 = vsel %vm976, %v967, %v969
        %v981 = vsel %vm976, %v965, %v967
        %v982 = vsel %vm976, %v975, %v965
        %v983 = vpack.c.bf16 %v981, %v981
        %v984 = vpack.c.bf16 %v980, %v980
        %v985 = vpack.c.bf16 %v979, %v979
        %v986 = vpack.c.bf16 %v978, %v978
        %v987 = vpack.c.bf16 %v977, %v977
        %v988 = vpack.c.bf16 %v982, %v982
        %s989 = scalar_lea.vmem %s1, 20
        %v990 = vld [vmem:[%s989] sm:$0xf]
        %v992 = vsel %vm343, %v990, 0
        %v995 = vsel %vm347, %v983, 0
        %v998 = vsel %vm347, %v984, 0
        %v1001 = vsel %vm347, %v985, 0
        %v1004 = vsel %vm347, %v986, 0
        %v1007 = vsel %vm347, %v987, 0
        %v1010 = vsel %vm347, %v988, 0
        %1012 = vmatpush.bf16.msra.mxu0 0
        %1013 = vmatpush.bf16.msra.mxu0 0
        %1014 = vmatpush.bf16.msra.mxu0 0
        %1015 = vmatpush.bf16.msra.mxu0 0
        %1016 = vmatpush.bf16.msra.mxu0 0
        %1017 = vmatpush.bf16.msra.mxu0 0
        %1018 = vmatpush.bf16.msra.mxu0 0
        %1019 = vmatpush.bf16.msra.mxu0 %v995
        %1020 = vmatmul.bf16.gmra.mxu0 %v992
        %v1021 = vpop.f32.mrf.mxu0
        %v1022 = vadd.f32 0.0, %v1021
        %v1023 = vpop.f32.mrf.mxu0
        %1024 = vdwg.mxu0
        %1025 = vmatpush.bf16.msra.mxu0 0
        %1026 = vmatpush.bf16.msra.mxu0 0
        %1027 = vmatpush.bf16.msra.mxu0 0
        %1028 = vmatpush.bf16.msra.mxu0 0
        %1029 = vmatpush.bf16.msra.mxu0 0
        %1030 = vmatpush.bf16.msra.mxu0 0
        %1031 = vmatpush.bf16.msra.mxu0 0
        %1032 = vmatpush.bf16.msra.mxu0 %v998
        %1033 = vmatmul.bf16.gmra.mxu0 %v992
        %v1034 = vpop.f32.mrf.mxu0
        %v1035 = vadd.f32 0.0, %v1034
        %v1036 = vpop.f32.mrf.mxu0
        %1037 = vdwg.mxu0
        %1038 = vmatpush.bf16.msra.mxu0 0
        %1039 = vmatpush.bf16.msra.mxu0 0
        %1040 = vmatpush.bf16.msra.mxu0 0
        %1041 = vmatpush.bf16.msra.mxu0 0
        %1042 = vmatpush.bf16.msra.mxu0 0
        %1043 = vmatpush.bf16.msra.mxu0 0
        %1044 = vmatpush.bf16.msra.mxu0 0
        %1045 = vmatpush.bf16.msra.mxu0 %v1001
        %1046 = vmatmul.bf16.gmra.mxu0 %v992
        %v1047 = vpop.f32.mrf.mxu0
        %v1048 = vadd.f32 0.0, %v1047
        %v1049 = vpop.f32.mrf.mxu0
        %1050 = vdwg.mxu0
        %1051 = vmatpush.bf16.msra.mxu0 0
        %1052 = vmatpush.bf16.msra.mxu0 0
        %1053 = vmatpush.bf16.msra.mxu0 0
        %1054 = vmatpush.bf16.msra.mxu0 0
        %1055 = vmatpush.bf16.msra.mxu0 0
        %1056 = vmatpush.bf16.msra.mxu0 0
        %1057 = vmatpush.bf16.msra.mxu0 0
        %1058 = vmatpush.bf16.msra.mxu0 %v1004
        %1059 = vmatmul.bf16.gmra.mxu0 %v992
        %v1060 = vpop.f32.mrf.mxu0
        %v1061 = vadd.f32 0.0, %v1060
        %v1062 = vpop.f32.mrf.mxu0
        %1063 = vdwg.mxu0
        %1064 = vmatpush.bf16.msra.mxu0 0
        %1065 = vmatpush.bf16.msra.mxu0 0
        %1066 = vmatpush.bf16.msra.mxu0 0
        %1067 = vmatpush.bf16.msra.mxu0 0
        %1068 = vmatpush.bf16.msra.mxu0 0
        %1069 = vmatpush.bf16.msra.mxu0 0
        %1070 = vmatpush.bf16.msra.mxu0 0
        %1071 = vmatpush.bf16.msra.mxu0 %v1007
        %1072 = vmatmul.bf16.gmra.mxu0 %v992
        %v1073 = vpop.f32.mrf.mxu0
        %v1074 = vadd.f32 0.0, %v1073
        %v1075 = vpop.f32.mrf.mxu0
        %1076 = vdwg.mxu0
        %1077 = vmatpush.bf16.msra.mxu0 0
        %1078 = vmatpush.bf16.msra.mxu0 0
        %1079 = vmatpush.bf16.msra.mxu0 0
        %1080 = vmatpush.bf16.msra.mxu0 0
        %1081 = vmatpush.bf16.msra.mxu0 0
        %1082 = vmatpush.bf16.msra.mxu0 0
        %1083 = vmatpush.bf16.msra.mxu0 0
        %1084 = vmatpush.bf16.msra.mxu0 %v1010
        %1085 = vmatmul.bf16.gmra.mxu0 %v992
        %v1086 = vpop.f32.mrf.mxu0
        %v1087 = vadd.f32 0.0, %v1086
        %v1088 = vpop.f32.mrf.mxu0
        %1089 = vdwg.mxu0
        %v1090 = vadd.f32 %v958, %v1022
        %v1091 = vadd.f32 %v959, %v1035
        %v1092 = vadd.f32 %v960, %v1048
        %v1093 = vadd.f32 %v961, %v1061
        %v1094 = vadd.f32 %v962, %v1074
        %v1095 = vadd.f32 %v963, %v1087
        %1096 = vrot.lane.b32.xlu0 %v296, 111
        %v1097 = vpop.permute.xlu0 %1096
        %1098 = vrot.lane.b32.xlu0 %v297, 111
        %v1099 = vpop.permute.xlu0 %1098
        %1100 = vrot.lane.b32.xlu0 %v298, 111
        %v1101 = vpop.permute.xlu0 %1100
        %1102 = vrot.lane.b32.xlu0 %v299, 111
        %v1103 = vpop.permute.xlu0 %1102
        %1104 = vrot.lane.b32.xlu0 %v300, 111
        %v1105 = vpop.permute.xlu0 %1104
        %1106 = vrot.lane.b32.xlu0 %v301, 111
        %v1107 = vpop.permute.xlu0 %1106
        %vm1108 = vcmp.lt.s32.totalorder %v328, 111
        %v1109 = vsel %vm1108, %v1105, %v1107
        %v1110 = vsel %vm1108, %v1103, %v1105
        %v1111 = vsel %vm1108, %v1101, %v1103
        %v1112 = vsel %vm1108, %v1099, %v1101
        %v1113 = vsel %vm1108, %v1097, %v1099
        %v1114 = vsel %vm1108, %v1107, %v1097
        %v1115 = vpack.c.bf16 %v1113, %v1113
        %v1116 = vpack.c.bf16 %v1112, %v1112
        %v1117 = vpack.c.bf16 %v1111, %v1111
        %v1118 = vpack.c.bf16 %v1110, %v1110
        %v1119 = vpack.c.bf16 %v1109, %v1109
        %v1120 = vpack.c.bf16 %v1114, %v1114
        %s1121 = scalar_lea.vmem %s1, 24
        %v1122 = vld [vmem:[%s1121] sm:$0xf]
        %v1124 = vsel %vm343, %v1122, 0
        %v1127 = vsel %vm347, %v1115, 0
        %v1130 = vsel %vm347, %v1116, 0
        %v1133 = vsel %vm347, %v1117, 0
        %v1136 = vsel %vm347, %v1118, 0
        %v1139 = vsel %vm347, %v1119, 0
        %v1142 = vsel %vm347, %v1120, 0
        %1144 = vmatpush.bf16.msra.mxu0 0
        %1145 = vmatpush.bf16.msra.mxu0 0
        %1146 = vmatpush.bf16.msra.mxu0 0
        %1147 = vmatpush.bf16.msra.mxu0 0
        %1148 = vmatpush.bf16.msra.mxu0 0
        %1149 = vmatpush.bf16.msra.mxu0 0
        %1150 = vmatpush.bf16.msra.mxu0 0
        %1151 = vmatpush.bf16.msra.mxu0 %v1127
        %1152 = vmatmul.bf16.gmra.mxu0 %v1124
        %v1153 = vpop.f32.mrf.mxu0
        %v1154 = vadd.f32 0.0, %v1153
        %v1155 = vpop.f32.mrf.mxu0
        %1156 = vdwg.mxu0
        %1157 = vmatpush.bf16.msra.mxu0 0
        %1158 = vmatpush.bf16.msra.mxu0 0
        %1159 = vmatpush.bf16.msra.mxu0 0
        %1160 = vmatpush.bf16.msra.mxu0 0
        %1161 = vmatpush.bf16.msra.mxu0 0
        %1162 = vmatpush.bf16.msra.mxu0 0
        %1163 = vmatpush.bf16.msra.mxu0 0
        %1164 = vmatpush.bf16.msra.mxu0 %v1130
        %1165 = vmatmul.bf16.gmra.mxu0 %v1124
        %v1166 = vpop.f32.mrf.mxu0
        %v1167 = vadd.f32 0.0, %v1166
        %v1168 = vpop.f32.mrf.mxu0
        %1169 = vdwg.mxu0
        %1170 = vmatpush.bf16.msra.mxu0 0
        %1171 = vmatpush.bf16.msra.mxu0 0
        %1172 = vmatpush.bf16.msra.mxu0 0
        %1173 = vmatpush.bf16.msra.mxu0 0
        %1174 = vmatpush.bf16.msra.mxu0 0
        %1175 = vmatpush.bf16.msra.mxu0 0
        %1176 = vmatpush.bf16.msra.mxu0 0
        %1177 = vmatpush.bf16.msra.mxu0 %v1133
        %1178 = vmatmul.bf16.gmra.mxu0 %v1124
        %v1179 = vpop.f32.mrf.mxu0
        %v1180 = vadd.f32 0.0, %v1179
        %v1181 = vpop.f32.mrf.mxu0
        %1182 = vdwg.mxu0
        %1183 = vmatpush.bf16.msra.mxu0 0
        %1184 = vmatpush.bf16.msra.mxu0 0
        %1185 = vmatpush.bf16.msra.mxu0 0
        %1186 = vmatpush.bf16.msra.mxu0 0
        %1187 = vmatpush.bf16.msra.mxu0 0
        %1188 = vmatpush.bf16.msra.mxu0 0
        %1189 = vmatpush.bf16.msra.mxu0 0
        %1190 = vmatpush.bf16.msra.mxu0 %v1136
        %1191 = vmatmul.bf16.gmra.mxu0 %v1124
        %v1192 = vpop.f32.mrf.mxu0
        %v1193 = vadd.f32 0.0, %v1192
        %v1194 = vpop.f32.mrf.mxu0
        %1195 = vdwg.mxu0
        %1196 = vmatpush.bf16.msra.mxu0 0
        %1197 = vmatpush.bf16.msra.mxu0 0
        %1198 = vmatpush.bf16.msra.mxu0 0
        %1199 = vmatpush.bf16.msra.mxu0 0
        %1200 = vmatpush.bf16.msra.mxu0 0
        %1201 = vmatpush.bf16.msra.mxu0 0
        %1202 = vmatpush.bf16.msra.mxu0 0
        %1203 = vmatpush.bf16.msra.mxu0 %v1139
        %1204 = vmatmul.bf16.gmra.mxu0 %v1124
        %v1205 = vpop.f32.mrf.mxu0
        %v1206 = vadd.f32 0.0, %v1205
        %v1207 = vpop.f32.mrf.mxu0
        %1208 = vdwg.mxu0
        %1209 = vmatpush.bf16.msra.mxu0 0
        %1210 = vmatpush.bf16.msra.mxu0 0
        %1211 = vmatpush.bf16.msra.mxu0 0
        %1212 = vmatpush.bf16.msra.mxu0 0
        %1213 = vmatpush.bf16.msra.mxu0 0
        %1214 = vmatpush.bf16.msra.mxu0 0
        %1215 = vmatpush.bf16.msra.mxu0 0
        %1216 = vmatpush.bf16.msra.mxu0 %v1142
        %1217 = vmatmul.bf16.gmra.mxu0 %v1124
        %v1218 = vpop.f32.mrf.mxu0
        %v1219 = vadd.f32 0.0, %v1218
        %v1220 = vpop.f32.mrf.mxu0
        %1221 = vdwg.mxu0
        %v1222 = vadd.f32 %v1090, %v1154
        %v1223 = vadd.f32 %v1091, %v1167
        %v1224 = vadd.f32 %v1092, %v1180
        %v1225 = vadd.f32 %v1093, %v1193
        %v1226 = vadd.f32 %v1094, %v1206
        %v1227 = vadd.f32 %v1095, %v1219
        %1228 = vrot.lane.b32.xlu0 %v296, 110
        %v1229 = vpop.permute.xlu0 %1228
        %1230 = vrot.lane.b32.xlu0 %v297, 110
        %v1231 = vpop.permute.xlu0 %1230
        %1232 = vrot.lane.b32.xlu0 %v298, 110
        %v1233 = vpop.permute.xlu0 %1232
        %1234 = vrot.lane.b32.xlu0 %v299, 110
        %v1235 = vpop.permute.xlu0 %1234
        %1236 = vrot.lane.b32.xlu0 %v300, 110
        %v1237 = vpop.permute.xlu0 %1236
        %1238 = vrot.lane.b32.xlu0 %v301, 110
        %v1239 = vpop.permute.xlu0 %1238
        %vm1240 = vcmp.lt.s32.totalorder %v328, 110
        %v1241 = vsel %vm1240, %v1237, %v1239
        %v1242 = vsel %vm1240, %v1235, %v1237
        %v1243 = vsel %vm1240, %v1233, %v1235
        %v1244 = vsel %vm1240, %v1231, %v1233
        %v1245 = vsel %vm1240, %v1229, %v1231
        %v1246 = vsel %vm1240, %v1239, %v1229
        %v1247 = vpack.c.bf16 %v1245, %v1245
        %v1248 = vpack.c.bf16 %v1244, %v1244
        %v1249 = vpack.c.bf16 %v1243, %v1243
        %v1250 = vpack.c.bf16 %v1242, %v1242
        %v1251 = vpack.c.bf16 %v1241, %v1241
        %v1252 = vpack.c.bf16 %v1246, %v1246
        %s1253 = scalar_lea.vmem %s1, 28
        %v1254 = vld [vmem:[%s1253] sm:$0xf]
        %v1256 = vsel %vm343, %v1254, 0
        %v1259 = vsel %vm347, %v1247, 0
        %v1262 = vsel %vm347, %v1248, 0
        %v1265 = vsel %vm347, %v1249, 0
        %v1268 = vsel %vm347, %v1250, 0
        %v1271 = vsel %vm347, %v1251, 0
        %v1274 = vsel %vm347, %v1252, 0
        %1276 = vmatpush.bf16.msra.mxu0 0
        %1277 = vmatpush.bf16.msra.mxu0 0
        %1278 = vmatpush.bf16.msra.mxu0 0
        %1279 = vmatpush.bf16.msra.mxu0 0
        %1280 = vmatpush.bf16.msra.mxu0 0
        %1281 = vmatpush.bf16.msra.mxu0 0
        %1282 = vmatpush.bf16.msra.mxu0 0
        %1283 = vmatpush.bf16.msra.mxu0 %v1259
        %1284 = vmatmul.bf16.gmra.mxu0 %v1256
        %v1285 = vpop.f32.mrf.mxu0
        %v1286 = vadd.f32 0.0, %v1285
        %v1287 = vpop.f32.mrf.mxu0
        %1288 = vdwg.mxu0
        %1289 = vmatpush.bf16.msra.mxu0 0
        %1290 = vmatpush.bf16.msra.mxu0 0
        %1291 = vmatpush.bf16.msra.mxu0 0
        %1292 = vmatpush.bf16.msra.mxu0 0
        %1293 = vmatpush.bf16.msra.mxu0 0
        %1294 = vmatpush.bf16.msra.mxu0 0
        %1295 = vmatpush.bf16.msra.mxu0 0
        %1296 = vmatpush.bf16.msra.mxu0 %v1262
        %1297 = vmatmul.bf16.gmra.mxu0 %v1256
        %v1298 = vpop.f32.mrf.mxu0
        %v1299 = vadd.f32 0.0, %v1298
        %v1300 = vpop.f32.mrf.mxu0
        %1301 = vdwg.mxu0
        %1302 = vmatpush.bf16.msra.mxu0 0
        %1303 = vmatpush.bf16.msra.mxu0 0
        %1304 = vmatpush.bf16.msra.mxu0 0
        %1305 = vmatpush.bf16.msra.mxu0 0
        %1306 = vmatpush.bf16.msra.mxu0 0
        %1307 = vmatpush.bf16.msra.mxu0 0
        %1308 = vmatpush.bf16.msra.mxu0 0
        %1309 = vmatpush.bf16.msra.mxu0 %v1265
        %1310 = vmatmul.bf16.gmra.mxu0 %v1256
        %v1311 = vpop.f32.mrf.mxu0
        %v1312 = vadd.f32 0.0, %v1311
        %v1313 = vpop.f32.mrf.mxu0
        %1314 = vdwg.mxu0
        %1315 = vmatpush.bf16.msra.mxu0 0
        %1316 = vmatpush.bf16.msra.mxu0 0
        %1317 = vmatpush.bf16.msra.mxu0 0
        %1318 = vmatpush.bf16.msra.mxu0 0
        %1319 = vmatpush.bf16.msra.mxu0 0
        %1320 = vmatpush.bf16.msra.mxu0 0
        %1321 = vmatpush.bf16.msra.mxu0 0
        %1322 = vmatpush.bf16.msra.mxu0 %v1268
        %1323 = vmatmul.bf16.gmra.mxu0 %v1256
        %v1324 = vpop.f32.mrf.mxu0
        %v1325 = vadd.f32 0.0, %v1324
        %v1326 = vpop.f32.mrf.mxu0
        %1327 = vdwg.mxu0
        %1328 = vmatpush.bf16.msra.mxu0 0
        %1329 = vmatpush.bf16.msra.mxu0 0
        %1330 = vmatpush.bf16.msra.mxu0 0
        %1331 = vmatpush.bf16.msra.mxu0 0
        %1332 = vmatpush.bf16.msra.mxu0 0
        %1333 = vmatpush.bf16.msra.mxu0 0
        %1334 = vmatpush.bf16.msra.mxu0 0
        %1335 = vmatpush.bf16.msra.mxu0 %v1271
        %1336 = vmatmul.bf16.gmra.mxu0 %v1256
        %v1337 = vpop.f32.mrf.mxu0
        %v1338 = vadd.f32 0.0, %v1337
        %v1339 = vpop.f32.mrf.mxu0
        %1340 = vdwg.mxu0
        %1341 = vmatpush.bf16.msra.mxu0 0
        %1342 = vmatpush.bf16.msra.mxu0 0
        %1343 = vmatpush.bf16.msra.mxu0 0
        %1344 = vmatpush.bf16.msra.mxu0 0
        %1345 = vmatpush.bf16.msra.mxu0 0
        %1346 = vmatpush.bf16.msra.mxu0 0
        %1347 = vmatpush.bf16.msra.mxu0 0
        %1348 = vmatpush.bf16.msra.mxu0 %v1274
        %1349 = vmatmul.bf16.gmra.mxu0 %v1256
        %v1350 = vpop.f32.mrf.mxu0
        %v1351 = vadd.f32 0.0, %v1350
        %v1352 = vpop.f32.mrf.mxu0
        %1353 = vdwg.mxu0
        %v1354 = vadd.f32 %v1222, %v1286
        %v1355 = vadd.f32 %v1223, %v1299
        %v1356 = vadd.f32 %v1224, %v1312
        %v1357 = vadd.f32 %v1225, %v1325
        %v1358 = vadd.f32 %v1226, %v1338
        %v1359 = vadd.f32 %v1227, %v1351
        %1360 = vrot.lane.b32.xlu0 %v296, 109
        %v1361 = vpop.permute.xlu0 %1360
        %1362 = vrot.lane.b32.xlu0 %v297, 109
        %v1363 = vpop.permute.xlu0 %1362
        %1364 = vrot.lane.b32.xlu0 %v298, 109
        %v1365 = vpop.permute.xlu0 %1364
        %1366 = vrot.lane.b32.xlu0 %v299, 109
        %v1367 = vpop.permute.xlu0 %1366
        %1368 = vrot.lane.b32.xlu0 %v300, 109
        %v1369 = vpop.permute.xlu0 %1368
        %1370 = vrot.lane.b32.xlu0 %v301, 109
        %v1371 = vpop.permute.xlu0 %1370
        %vm1372 = vcmp.lt.s32.totalorder %v328, 109
        %v1373 = vsel %vm1372, %v1369, %v1371
        %v1374 = vsel %vm1372, %v1367, %v1369
        %v1375 = vsel %vm1372, %v1365, %v1367
        %v1376 = vsel %vm1372, %v1363, %v1365
        %v1377 = vsel %vm1372, %v1361, %v1363
        %v1378 = vsel %vm1372, %v1371, %v1361
        %v1379 = vpack.c.bf16 %v1377, %v1377
        %v1380 = vpack.c.bf16 %v1376, %v1376
        %v1381 = vpack.c.bf16 %v1375, %v1375
        %v1382 = vpack.c.bf16 %v1374, %v1374
        %v1383 = vpack.c.bf16 %v1373, %v1373
        %v1384 = vpack.c.bf16 %v1378, %v1378
        %s1385 = scalar_lea.vmem %s1, 32
        %v1386 = vld [vmem:[%s1385] sm:$0xf]
        %v1388 = vsel %vm343, %v1386, 0
        %v1391 = vsel %vm347, %v1379, 0
        %v1394 = vsel %vm347, %v1380, 0
        %v1397 = vsel %vm347, %v1381, 0
        %v1400 = vsel %vm347, %v1382, 0
        %v1403 = vsel %vm347, %v1383, 0
        %v1406 = vsel %vm347, %v1384, 0
        %1408 = vmatpush.bf16.msra.mxu0 0
        %1409 = vmatpush.bf16.msra.mxu0 0
        %1410 = vmatpush.bf16.msra.mxu0 0
        %1411 = vmatpush.bf16.msra.mxu0 0
        %1412 = vmatpush.bf16.msra.mxu0 0
        %1413 = vmatpush.bf16.msra.mxu0 0
        %1414 = vmatpush.bf16.msra.mxu0 0
        %1415 = vmatpush.bf16.msra.mxu0 %v1391
        %1416 = vmatmul.bf16.gmra.mxu0 %v1388
        %v1417 = vpop.f32.mrf.mxu0
        %v1418 = vadd.f32 0.0, %v1417
        %v1419 = vpop.f32.mrf.mxu0
        %1420 = vdwg.mxu0
        %1421 = vmatpush.bf16.msra.mxu0 0
        %1422 = vmatpush.bf16.msra.mxu0 0
        %1423 = vmatpush.bf16.msra.mxu0 0
        %1424 = vmatpush.bf16.msra.mxu0 0
        %1425 = vmatpush.bf16.msra.mxu0 0
        %1426 = vmatpush.bf16.msra.mxu0 0
        %1427 = vmatpush.bf16.msra.mxu0 0
        %1428 = vmatpush.bf16.msra.mxu0 %v1394
        %1429 = vmatmul.bf16.gmra.mxu0 %v1388
        %v1430 = vpop.f32.mrf.mxu0
        %v1431 = vadd.f32 0.0, %v1430
        %v1432 = vpop.f32.mrf.mxu0
        %1433 = vdwg.mxu0
        %1434 = vmatpush.bf16.msra.mxu0 0
        %1435 = vmatpush.bf16.msra.mxu0 0
        %1436 = vmatpush.bf16.msra.mxu0 0
        %1437 = vmatpush.bf16.msra.mxu0 0
        %1438 = vmatpush.bf16.msra.mxu0 0
        %1439 = vmatpush.bf16.msra.mxu0 0
        %1440 = vmatpush.bf16.msra.mxu0 0
        %1441 = vmatpush.bf16.msra.mxu0 %v1397
        %1442 = vmatmul.bf16.gmra.mxu0 %v1388
        %v1443 = vpop.f32.mrf.mxu0
        %v1444 = vadd.f32 0.0, %v1443
        %v1445 = vpop.f32.mrf.mxu0
        %1446 = vdwg.mxu0
        %1447 = vmatpush.bf16.msra.mxu0 0
        %1448 = vmatpush.bf16.msra.mxu0 0
        %1449 = vmatpush.bf16.msra.mxu0 0
        %1450 = vmatpush.bf16.msra.mxu0 0
        %1451 = vmatpush.bf16.msra.mxu0 0
        %1452 = vmatpush.bf16.msra.mxu0 0
        %1453 = vmatpush.bf16.msra.mxu0 0
        %1454 = vmatpush.bf16.msra.mxu0 %v1400
        %1455 = vmatmul.bf16.gmra.mxu0 %v1388
        %v1456 = vpop.f32.mrf.mxu0
        %v1457 = vadd.f32 0.0, %v1456
        %v1458 = vpop.f32.mrf.mxu0
        %1459 = vdwg.mxu0
        %1460 = vmatpush.bf16.msra.mxu0 0
        %1461 = vmatpush.bf16.msra.mxu0 0
        %1462 = vmatpush.bf16.msra.mxu0 0
        %1463 = vmatpush.bf16.msra.mxu0 0
        %1464 = vmatpush.bf16.msra.mxu0 0
        %1465 = vmatpush.bf16.msra.mxu0 0
        %1466 = vmatpush.bf16.msra.mxu0 0
        %1467 = vmatpush.bf16.msra.mxu0 %v1403
        %1468 = vmatmul.bf16.gmra.mxu0 %v1388
        %v1469 = vpop.f32.mrf.mxu0
        %v1470 = vadd.f32 0.0, %v1469
        %v1471 = vpop.f32.mrf.mxu0
        %1472 = vdwg.mxu0
        %1473 = vmatpush.bf16.msra.mxu0 0
        %1474 = vmatpush.bf16.msra.mxu0 0
        %1475 = vmatpush.bf16.msra.mxu0 0
        %1476 = vmatpush.bf16.msra.mxu0 0
        %1477 = vmatpush.bf16.msra.mxu0 0
        %1478 = vmatpush.bf16.msra.mxu0 0
        %1479 = vmatpush.bf16.msra.mxu0 0
        %1480 = vmatpush.bf16.msra.mxu0 %v1406
        %1481 = vmatmul.bf16.gmra.mxu0 %v1388
        %v1482 = vpop.f32.mrf.mxu0
        %v1483 = vadd.f32 0.0, %v1482
        %v1484 = vpop.f32.mrf.mxu0
        %1485 = vdwg.mxu0
        %v1486 = vadd.f32 %v1354, %v1418
        %v1487 = vadd.f32 %v1355, %v1431
        %v1488 = vadd.f32 %v1356, %v1444
        %v1489 = vadd.f32 %v1357, %v1457
        %v1490 = vadd.f32 %v1358, %v1470
        %v1491 = vadd.f32 %v1359, %v1483
        %v1492 = vld [vmem:[#allocation3] sm:$0xff]
        %v1493 = vld [vmem:[#allocation3 + $0x8] sm:$0xff]
        %v1494 = vld [vmem:[#allocation3 + $0x10] sm:$0xff]
        %v1495 = vld [vmem:[#allocation3 + $0x18] sm:$0xff]
        %v1496 = vld [vmem:[#allocation3 + $0x20] sm:$0xff]
        %v1497 = vld [vmem:[#allocation3 + $0x28] sm:$0xff]
        %v1498 = vadd.f32 %v1492, %v1486
        %v1499 = vadd.f32 %v1493, %v1487
        %v1500 = vadd.f32 %v1494, %v1488
        %v1501 = vadd.f32 %v1495, %v1489
        %v1502 = vadd.f32 %v1496, %v1490
        %v1503 = vadd.f32 %v1497, %v1491
        %vm1504 = vcmp.ge.f32.partialorder %v1498, 1.0
        %vm1505 = vcmp.ge.f32.partialorder %v1499, 1.0
        %vm1506 = vcmp.ge.f32.partialorder %v1500, 1.0
        %vm1507 = vcmp.ge.f32.partialorder %v1501, 1.0
        %vm1508 = vcmp.ge.f32.partialorder %v1502, 1.0
        %vm1509 = vcmp.ge.f32.partialorder %v1503, 1.0
        %v1510 = vld [vmem:[%s252] sm:$0x3f]
        %v1512 = vperm.slane %v1510, 0
        %v1513 = vperm.slane %v1510, 1
        %v1514 = vperm.slane %v1510, 2
        %v1515 = vperm.slane %v1510, 3
        %v1516 = vperm.slane %v1510, 4
        %v1517 = vperm.slane %v1510, 5
        %v1524 = vsel %vm1504, %v1512, 0.0
        %v1525 = vsel %vm1505, %v1513, 0.0
        %v1526 = vsel %vm1506, %v1514, 0.0
        %v1527 = vsel %vm1507, %v1515, 0.0
        %v1528 = vsel %vm1508, %v1516, 0.0
        %v1529 = vsel %vm1509, %v1517, 0.0
        %v1530 = vpack.c.bf16 %v1525, %v1524
        %v1531 = vpack.c.bf16 %v1527, %v1526
        %v1532 = vpack.c.bf16 %v1529, %v1528
        %1533 = vst [vmem:[%s247] sm:$0xff] %v1530
        %1534 = vst [vmem:[%s247 + $0x8] sm:$0xff] %v1531
        %1535 = vst [vmem:[%s247 + $0x10] sm:$0xff] %v1532
        %v1536 = vsel %vm1504, 0.0, %v1498
        %v1537 = vsel %vm1505, 0.0, %v1499
        %v1538 = vsel %vm1506, 0.0, %v1500
        %v1539 = vsel %vm1507, 0.0, %v1501
        %v1540 = vsel %vm1508, 0.0, %v1502
        %v1541 = vsel %vm1509, 0.0, %v1503
        %1542 = vst [vmem:[#allocation3] sm:$0xff] %v1536
        %1543 = vst [vmem:[#allocation3 + $0x8] sm:$0xff] %v1537
        %1544 = vst [vmem:[#allocation3 + $0x10] sm:$0xff] %v1538
        %1545 = vst [vmem:[#allocation3 + $0x18] sm:$0xff] %v1539
        %1546 = vst [vmem:[#allocation3 + $0x20] sm:$0xff] %v1540
        %1547 = vst [vmem:[#allocation3 + $0x28] sm:$0xff] %v1541
        %s1548 = sand.u32 %s139, 1
        %s1549 = scalar_lea.sflag [#allocation6], %s1548
        %s1550 = sand.u32 %s139, 1
        %s1551 = smul.addr %s1550, 24
        %s1552 = scalar_lea.vmem [#allocation7], %s1551
        // Predicated region
        $region45: #{tpu_custom_call.1} parent=35 // pred_check
          %p1553 = pneg %p149
        $region46: #{tpu_custom_call.1} parent=35 // pred_check_branch
          %1555 = sbr.rel (%p1553) target = $region48
        $region47: #{tpu_custom_call.1} parent=35 // pred_region
          %s1556 = smul.u32 6, %s25
          %1558 = vsyncadd %s1549, 0
          %s1559 = smul.addr %s26, 6
          %s1560 = sadd.s32 %s1556, %s1559
          %s1561 = smul.addr %s1560, 4
          %s1562 = scalar_lea.hbm %s4, %s1561
          %s1564 = sshll.u32 %s1552, 4
          %s1565 = int_to_ptr.vmem [resolvable:$true] %s1564
          %s1566 = sshll.u32 %s1562, 4
          %s1567 = int_to_ptr.hbm [resolvable:$true] %s1566
          %1569 = dma.vmem_to_hbm [thread:$0]  %s1565, 384, %s1567, %s1549
        $region48: #{tpu_custom_call.1} parent=35 // pred_fallthru
          _
      $region36: #{tpu_custom_call.1} parent=5 // pred_fallthru
        _
      %p1570 = scmp.le.s32.totalorder 2, %s16
      // Predicated region
      $region49: #{tpu_custom_call.1} parent=5 // pred_check
        %p1571 = pneg %p1570
      $region50: #{tpu_custom_call.1} parent=5 // pred_check_branch
        %1573 = sbr.rel (%p1571) target = $region52
      $region51: #{tpu_custom_call.1} parent=5 // pred_region
        %s1574 = ssub.s32 %s16, 2
        // Predicated region
        $region53: #{tpu_custom_call.1} parent=51 // pred_check
          %p1575 = pneg %p155
        $region54: #{tpu_custom_call.1} parent=51 // pred_check_branch
          %1577 = sbr.rel (%p1575) target = $region56
        $region55: #{tpu_custom_call.1} parent=51 // pred_region
          %s1578 = sand.u32 %s140, 1
          %s1579 = scalar_lea.sflag [#allocation6], %s1578
          %s1580 = sand.u32 %s140, 1
          %s1581 = smul.addr %s1580, 24
          %s1582 = scalar_lea.vmem [#allocation7], %s1581
          %1584 = dma.done %s1579, 384
        $region56: #{tpu_custom_call.1} parent=51 // pred_fallthru
          _
      $region52: #{tpu_custom_call.1} parent=5 // pred_fallthru
        _
    $region6: #{tpu_custom_call.1} parent=1 // loop_footer
      %s20 = sadd.s32 1, %s16
    $region7: #{tpu_custom_call.1} parent=1 // loop_footer_branch
      %15 = sbr.rel target = $region3
    $region8: #{tpu_custom_call.1} parent=1 // loop_exit
      _
    %1585 = vsyncpa [#allocation5], 1
    %s1586 = scalar_lea.sflag [#allocation5], 1
    %1587 = vsyncpa %s1586, 1
    %1588 = vsyncpa [#allocation6], 1
    %s1589 = scalar_lea.sflag [#allocation6], 1
    %1590 = vsyncpa %s1589, 1

</llo_original>
